<compile_context>
chip_gen: v6e
topology: v6e:2x2x1
jax: 0.10.0
libtpu: 0.0.40
codegen_flags: <defaults>
</compile_context>

<pallas_src>
import functools

import jax
import jax.numpy as jnp
from jax.experimental import pallas as pl
from jax.experimental.pallas import tpu as pltpu

NEG_INF = -1e30                   # f32 additive mask for non-edges
STORE_DTYPE = jnp.bfloat16        # storage dtype for the big O(N) streams


@functools.lru_cache(maxsize=1)
def _vmem_limit_bytes():
    # Generation-aware scoped-VMEM limit: ~75% of physical capacity, capped.
    try:
        cap = pltpu.get_tpu_info().vmem_capacity_bytes
    except Exception:
        cap = 64 * 1024 * 1024
    return int(min(cap * 3 // 4, 96 * 1024 * 1024))


def _round_up(x, m):
    return ((x + m - 1) // m) * m


def _pick_tile(n, preferred):
    for t in preferred:
        if t <= n and n % t == 0:
            return t
    return n


def _pad_axis(a, target, axis):
    pad = target - a.shape[axis]
    if pad <= 0:
        return a
    widths = [(0, 0)] * a.ndim
    widths[axis] = (0, pad)
    return jnp.pad(a, widths)


# ----------------------------------------------------------------------------
# Kernel 0: per-metapath feature projection (done ONCE, not per dst tile).
# grid = (P, node_tiles).  Emits feat_proj (bf16) and per-head attn scores
# el/er (f32) so the GAT kernel only streams adjacency + projected features.
# ----------------------------------------------------------------------------
def proj_kernel(x_ref, w_ref, al_ref, ar_ref, fp_ref, el_ref, er_ref):
    feat = jnp.dot(x_ref[...].astype(jnp.float32), w_ref[...],
                   preferred_element_type=jnp.float32)            # [Tn, H*D]
    fp_ref[...] = feat.astype(fp_ref.dtype)
    el_ref[...] = jnp.dot(feat, al_ref[...], preferred_element_type=jnp.float32)
    er_ref[...] = jnp.dot(feat, ar_ref[...], preferred_element_type=jnp.float32)


def run_projection(x, w, al, ar, *, heads, tile_n):
    num_paths, fin, hd = w.shape
    n_pad = x.shape[0]
    grid = (num_paths, n_pad // tile_n)
    return pl.pallas_call(
        proj_kernel,
        out_shape=(jax.ShapeDtypeStruct((num_paths, n_pad, hd), STORE_DTYPE),
                   jax.ShapeDtypeStruct((num_paths, n_pad, heads), jnp.float32),
                   jax.ShapeDtypeStruct((num_paths, n_pad, heads), jnp.float32)),
        grid=grid,
        in_specs=[
            pl.BlockSpec((tile_n, fin), lambda p, i: (i, 0)),
            pl.BlockSpec((None, fin, hd), lambda p, i: (p, 0, 0)),
            pl.BlockSpec((None, hd, heads), lambda p, i: (p, 0, 0)),
            pl.BlockSpec((None, hd, heads), lambda p, i: (p, 0, 0)),
        ],
        out_specs=(
            pl.BlockSpec((None, tile_n, hd), lambda p, i: (p, i, 0)),
            pl.BlockSpec((None, tile_n, heads), lambda p, i: (p, i, 0)),
            pl.BlockSpec((None, tile_n, heads), lambda p, i: (p, i, 0)),
        ),
        compiler_params=pltpu.CompilerParams(
            dimension_semantics=("parallel", "parallel"),
            vmem_limit_bytes=_vmem_limit_bytes()),
    )(x, w, al, ar)


# ----------------------------------------------------------------------------
# Kernel 1: all-metapath GATConv with online (flash-style) edge softmax.
# grid = (P, dst_tiles, src_tiles); src axis is the reduction axis.
# ----------------------------------------------------------------------------
def gat_kernel(fs_ref, el_ref, er_ref, adj_ref, b_ref, o_ref,
               m_scr, l_scr, acc_scr, *, heads, head_dim):
    j = pl.program_id(2)
    nj = pl.num_programs(2)

    @pl.when(j == 0)
    def _init():
        m_scr[...] = jnp.full_like(m_scr, NEG_INF)
        l_scr[...] = jnp.zeros_like(l_scr)
        acc_scr[...] = jnp.zeros_like(acc_scr)

    # Mask hoisted out of the head loop: one int8 compare -> additive -inf.
    mask_add = jnp.where(adj_ref[...] > 0, 0.0, NEG_INF)          # [Td, Ts]
    feat_s = fs_ref[...].astype(jnp.float32)                      # [Ts, H*D]
    el_t = el_ref[...].T                                          # [H, Ts]
    er = er_ref[...]                                              # [Td, H]
    td = er.shape[0]
    ones_col = jnp.ones((feat_s.shape[0], 1), jnp.float32)

    # Running state: one full-width load per step (no per-head sub-loads).
    m_prev = m_scr[...]                                           # [Td, H]
    l_prev = l_scr[...]
    acc_prev = acc_scr[...]                                       # [Td, H*D]

    m_cols, rs_cols, pv_cols = [], [], []
    for h in range(heads):                                        # static, unrolled
        sl = slice(h * head_dim, (h + 1) * head_dim)
        e = er[:, h:h + 1] + el_t[h:h + 1, :]                     # [Td, Ts]
        e = jnp.maximum(e, 0.2 * e) + mask_add                    # LeakyReLU(0.2) + mask
        m_h = jnp.maximum(m_prev[:, h:h + 1],
                          jnp.max(e, axis=1, keepdims=True))
        p = jnp.exp(e - m_h)                                      # non-edges underflow to 0
        # One MXU dot gives both the PV update and the softmax row-sum
        # (ones column appended to the per-head value slice) -> no XLU reduce.
        v_ext = jnp.concatenate([feat_s[:, sl], ones_col], axis=1)       # [Ts, D+1]
        pv_ext = jnp.dot(p, v_ext, preferred_element_type=jnp.float32)   # [Td, D+1]
        m_cols.append(m_h)
        pv_cols.append(pv_ext[:, :head_dim])
        rs_cols.append(pv_ext[:, head_dim:head_dim + 1])

    m_new = jnp.concatenate(m_cols, axis=1)                       # [Td, H]
    corr = jnp.exp(m_prev - m_new)                                # online-softmax correction
    l_new = corr * l_prev + jnp.concatenate(rs_cols, axis=1)      # [Td, H]
    corr_wide = jnp.concatenate(
        [jnp.broadcast_to(corr[:, h:h + 1], (td, head_dim)) for h in range(heads)],
        axis=1)                                                   # [Td, H*D]
    acc_new = corr_wide * acc_prev + jnp.concatenate(pv_cols, axis=1)

    # One full-width lane-dense store per scratch per step.
    m_scr[...] = m_new
    l_scr[...] = l_new
    acc_scr[...] = acc_new

    @pl.when(j == nj - 1)
    def _finalize():
        inv = 1.0 / jnp.where(l_new > 0, l_new, 1.0)              # exact (cold path)
        scale = jnp.where(m_new > 0.5 * NEG_INF, inv, 0.0)        # zero-in-degree -> 0
        scale_wide = jnp.concatenate(
            [jnp.broadcast_to(scale[:, h:h + 1], (td, head_dim)) for h in range(heads)],
            axis=1)
        out = acc_new * scale_wide + b_ref[...]
        o_ref[...] = jnp.maximum(out, 0.0).astype(o_ref.dtype)    # ReLU, lane-dense store


def run_gat_all_paths(feat_proj, el, er, adj_i8, bias, *, heads, head_dim,
                      tile_dst, tile_src):
    num_paths, n_pad, hd = feat_proj.shape
    grid = (num_paths, n_pad // tile_dst, n_pad // tile_src)
    kernel = functools.partial(gat_kernel, heads=heads, head_dim=head_dim)
    return pl.pallas_call(
        kernel,
        out_shape=jax.ShapeDtypeStruct((num_paths, n_pad, hd), STORE_DTYPE),
        grid=grid,
        in_specs=[
            pl.BlockSpec((None, tile_src, hd), lambda p, i, j: (p, j, 0)),        # feat_proj (src)
            pl.BlockSpec((None, tile_src, heads), lambda p, i, j: (p, j, 0)),     # el (src)
            pl.BlockSpec((None, tile_dst, heads), lambda p, i, j: (p, i, 0)),     # er (dst)
            pl.BlockSpec((None, tile_dst, tile_src), lambda p, i, j: (p, i, j)),  # adjacency int8
            pl.BlockSpec((None, 1, hd), lambda p, i, j: (p, 0, 0)),               # bias
        ],
        out_specs=pl.BlockSpec((None, tile_dst, hd), lambda p, i, j: (p, i, 0)),
        scratch_shapes=[
            pltpu.VMEM((tile_dst, heads), jnp.float32),   # running max
            pltpu.VMEM((tile_dst, heads), jnp.float32),   # running denominator
            pltpu.VMEM((tile_dst, hd), jnp.float32),      # output accumulator
        ],
        compiler_params=pltpu.CompilerParams(
            dimension_semantics=("parallel", "parallel", "arbitrary"),
            vmem_limit_bytes=_vmem_limit_bytes()),
    )(feat_proj, el, er, adj_i8, bias)


# ----------------------------------------------------------------------------
# Kernel 2: SemanticAttention scores: w[p] = mean_n W2^T tanh(W1 z[p,n] + b1),
# beta = softmax_p(w).  grid = (node_tiles,) reduction; [P, Hs] accumulator.
# ----------------------------------------------------------------------------
def sem_score_kernel(z_ref, w1_ref, b1_ref, w2_ref, beta_ref, acc_scr,
                     *, n_valid, needs_mask):
    i = pl.program_id(0)
    ni = pl.num_programs(0)

    @pl.when(i == 0)
    def _init():
        acc_scr[...] = jnp.zeros_like(acc_scr)

    num_p, tn, f = z_ref.shape
    zf = z_ref[...].astype(jnp.float32).reshape(num_p * tn, f)    # leading-axis merge
    hproj = jnp.tanh(
        jnp.dot(zf, w1_ref[...], preferred_element_type=jnp.float32)
        + b1_ref[...])                                            # [P*Tn, Hs]
    hproj = hproj.reshape(num_p, tn, hproj.shape[-1])
    if needs_mask:                                                # drop padded node rows
        row = i * tn + jax.lax.broadcasted_iota(jnp.int32, (tn, 1), 0)
        hproj = hproj * (row < n_valid).astype(jnp.float32)[None, :, :]
    acc_scr[...] += jnp.sum(hproj, axis=1)                        # one reduce, one store

    @pl.when(i == ni - 1)
    def _finalize():
        w = jnp.dot(acc_scr[...], w2_ref[...],
                    preferred_element_type=jnp.float32) * (1.0 / n_valid)   # [P, 1]
        m = jnp.max(w, axis=0, keepdims=True)
        ew = jnp.exp(w - m)
        beta_ref[...] = (ew / jnp.sum(ew, axis=0, keepdims=True)).astype(beta_ref.dtype)


def run_semantic_scores(z, w1, b1, w2, *, n_valid, tile_n):
    num_paths, n_pad, f = z.shape
    hs = w1.shape[1]
    kernel = functools.partial(sem_score_kernel, n_valid=n_valid,
                               needs_mask=(n_pad != n_valid))
    return pl.pallas_call(
        kernel,
        out_shape=jax.ShapeDtypeStruct((num_paths, 1), jnp.float32),
        grid=(n_pad // tile_n,),
        in_specs=[
            pl.BlockSpec((num_paths, tile_n, f), lambda i: (0, i, 0)),
            pl.BlockSpec((f, hs), lambda i: (0, 0)),
            pl.BlockSpec((1, hs), lambda i: (0, 0)),
            pl.BlockSpec((hs, 1), lambda i: (0, 0)),
        ],
        out_specs=pl.BlockSpec((num_paths, 1), lambda i: (0, 0)),
        scratch_shapes=[pltpu.VMEM((num_paths, hs), jnp.float32)],
        compiler_params=pltpu.CompilerParams(
            dimension_semantics=("arbitrary",),
            vmem_limit_bytes=_vmem_limit_bytes()),
    )(z, w1, b1, w2)


# ----------------------------------------------------------------------------
# Kernel 3: weighted combine sum_p beta[p] * z[p], optionally fused with the
# final predict Linear (128-lane-padded output -> unmasked stores).
# ----------------------------------------------------------------------------
def sem_combine_kernel(z_ref, beta_ref, o_ref, *, num_paths):
    beta = beta_ref[...]                                          # [P, 1]
    z = z_ref[...].astype(jnp.float32)                            # [P, Tn, F]
    fused = beta[0:1, 0:1] * z[0]
    for p in range(1, num_paths):
        fused = fused + beta[p:p + 1, 0:1] * z[p]
    o_ref[...] = fused.astype(o_ref.dtype)


def sem_combine_predict_kernel(z_ref, beta_ref, wp_ref, bp_ref, o_ref, *, num_paths):
    beta = beta_ref[...]                                          # [P, 1]
    z = z_ref[...].astype(jnp.float32)                            # [P, Tn, F]
    fused = beta[0:1, 0:1] * z[0]
    for p in range(1, num_paths):
        fused = fused + beta[p:p + 1, 0:1] * z[p]                 # [Tn, F]
    logits = jnp.dot(fused, wp_ref[...],
                     preferred_element_type=jnp.float32) + bp_ref[...]
    o_ref[...] = logits.astype(o_ref.dtype)                       # lane-dense (padded to 128)


def run_semantic_combine(z, beta, wp=None, bp=None, *, tile_n):
    num_paths, n_pad, f = z.shape
    if wp is None:
        out_dim = f
        kernel = functools.partial(sem_combine_kernel, num_paths=num_paths)
        in_specs = [
            pl.BlockSpec((num_paths, tile_n, f), lambda i: (0, i, 0)),
            pl.BlockSpec((num_paths, 1), lambda i: (0, 0)),
        ]
        args = (z, beta)
    else:
        out_dim = wp.shape[1]
        kernel = functools.partial(sem_combine_predict_kernel, num_paths=num_paths)
        in_specs = [
            pl.BlockSpec((num_paths, tile_n, f), lambda i: (0, i, 0)),
            pl.BlockSpec((num_paths, 1), lambda i: (0, 0)),
            pl.BlockSpec((f, out_dim), lambda i: (0, 0)),
            pl.BlockSpec((1, out_dim), lambda i: (0, 0)),
        ]
        args = (z, beta, wp, bp)
    return pl.pallas_call(
        kernel,
        out_shape=jax.ShapeDtypeStruct((n_pad, out_dim), jnp.float32),
        grid=(n_pad // tile_n,),
        in_specs=in_specs,
        out_specs=pl.BlockSpec((tile_n, out_dim), lambda i: (i, 0)),
        compiler_params=pltpu.CompilerParams(
            dimension_semantics=("parallel",),
            vmem_limit_bytes=_vmem_limit_bytes()),
    )(*args)


# ----------------------------------------------------------------------------
# Parameter init (deterministic, synthetic) + full HAN forward
# ----------------------------------------------------------------------------
def init_han_params(key, num_features, hidden, heads, num_class, num_paths,
                    sem_hidden=128):
    params = {"layers": [], "num_class": num_class}
    in_dim = num_features
    for hid, nh in zip(hidden, heads):
        hd = nh * hid
        key, k1, k2, k3 = jax.random.split(key, 4)
        w = jax.random.normal(k1, (num_paths, in_dim, hd), jnp.float32) * 0.1
        al = jax.random.normal(k2, (num_paths, nh, hid), jnp.float32) * 0.1
        ar = jax.random.normal(k3, (num_paths, nh, hid), jnp.float32) * 0.1
        # Block-diagonal packing: AL[p, h*D + d, h] = al[p, h, d] so one MXU dot
        # (feat @ AL) yields all per-head attention scores at once.
        eye = jnp.eye(nh, dtype=jnp.float32)
        AL = (al[:, :, :, None] * eye[:, None, :]).reshape(num_paths, hd, nh)
        AR = (ar[:, :, :, None] * eye[:, None, :]).reshape(num_paths, hd, nh)
        bias = jnp.zeros((num_paths, 1, hd), jnp.float32)
        key, k4, k5 = jax.random.split(key, 3)
        w1 = jax.random.normal(k4, (hd, sem_hidden), jnp.float32) * 0.1
        b1 = jnp.zeros((1, sem_hidden), jnp.float32)
        w2 = jax.random.normal(k5, (sem_hidden, 1), jnp.float32) * 0.1
        params["layers"].append({"gat": (w, AL, AR, bias), "sem": (w1, b1, w2),
                                 "heads": nh, "head_dim": hid})
        in_dim = hd
    key, k6 = jax.random.split(key)
    c_pad = max(128, _round_up(num_class, 128))       # lane-dense predict output
    wp = jax.random.normal(k6, (in_dim, num_class), jnp.float32) * 0.1
    wp = jnp.concatenate(
        [wp, jnp.zeros((in_dim, c_pad - num_class), jnp.float32)], axis=1)
    bp = jnp.zeros((1, c_pad), jnp.float32)
    params["predict"] = (wp, bp)
    return params


def han_forward(params, feat, adj_i8):
    """feat: [N, num_features]; adj_i8: [P, N, N] int8, adj[p, dst, src] in {0,1}."""
    n = feat.shape[0]
    n_pad = _round_up(n, 128)                         # pad nodes instead of whole-array tiles
    gat_tile = _pick_tile(n_pad, (256, 128))
    sem_tile = _pick_tile(n_pad, (512, 256, 128))

    h = _pad_axis(feat, n_pad, 0)
    adj = _pad_axis(_pad_axis(adj_i8, n_pad, 1), n_pad, 2)   # padded rows/cols have no edges

    wp, bp = params["predict"]
    n_layers = len(params["layers"])
    for li, layer in enumerate(params["layers"]):
        w, AL, AR, bias = layer["gat"]
        fp, el, er = run_projection(h, w, AL, AR, heads=layer["heads"], tile_n=sem_tile)
        z = run_gat_all_paths(fp, el, er, adj, bias,
                              heads=layer["heads"], head_dim=layer["head_dim"],
                              tile_dst=gat_tile, tile_src=gat_tile)
        w1, b1, w2 = layer["sem"]
        beta = run_semantic_scores(z, w1, b1, w2, n_valid=n, tile_n=sem_tile)
        if li == n_layers - 1:
            h = run_semantic_combine(z, beta, wp, bp, tile_n=sem_tile)   # + fused predict
        else:
            h = run_semantic_combine(z, beta, tile_n=sem_tile)
    return h[:n, :params["num_class"]]                # drop node padding + lane padding


# ----------------------------------------------------------------------------
if __name__ == "__main__":
    # Small HAN config: 2 metapaths, 1 HAN layer, hidden=[32], heads=[4]
    # (H*D = 128 -> lane-dense GAT output), num_features=64, num_class=8.
    # N=500 is deliberately NOT tile-aligned: it exercises the pad-to-512 +
    # semantic-mean masking path, a 2x2x2-tile GAT grid (256x256 tiles) and
    # the online edge softmax across multiple src tiles.
    N = 500
    num_features = 64
    hidden = [32]
    heads = [4]
    num_class = 8
    num_paths = 2

    key = jax.random.PRNGKey(0)
    key, kfeat, kadj, kparam = jax.random.split(key, 4)

    feat = jax.random.normal(kfeat, (N, num_features), jnp.float32)

    # Dense metapath-reachable adjacencies adj[p, dst, src] with self loops, int8.
    adj_keys = jax.random.split(kadj, num_paths)
    adjs = []
    for ak in adj_keys:
        a = jax.random.uniform(ak, (N, N)) < 0.05
        a = jnp.logical_or(a, jnp.eye(N, dtype=bool))
        adjs.append(a.astype(jnp.int8))
    adj_i8 = jnp.stack(adjs, axis=0)                  # [P, N, N] int8

    params = init_han_params(kparam, num_features, hidden, heads, num_class, num_paths)

    logits = jax.block_until_ready(han_forward(params, feat, adj_i8))
    assert logits.shape == (N, num_class), logits.shape
    assert bool(jnp.isfinite(logits).all()), "non-finite logits"
    print("KERNEL_OK")
</pallas_src>

<mosaic_0001>
module attributes {stable_mosaic.version = 11 : i64} {
  func.func @proj_kernel(%arg0: i32, %arg1: i32, %arg2: memref<512x64xf32, #tpu.memory_space<vmem>>, %arg3: memref<1x64x128xf32, #tpu.memory_space<vmem>>, %arg4: memref<1x128x4xf32, #tpu.memory_space<vmem>>, %arg5: memref<1x128x4xf32, #tpu.memory_space<vmem>>, %arg6: memref<1x512x128xbf16, #tpu.memory_space<vmem>>, %arg7: memref<1x512x4xf32, #tpu.memory_space<vmem>>, %arg8: memref<1x512x4xf32, #tpu.memory_space<vmem>>) attributes {dimension_semantics = [#tpu.dimension_semantics<parallel>, #tpu.dimension_semantics<parallel>], iteration_bounds = array<i64: 2, 1>, scalar_prefetch = 0 : i64, scratch_operands = 0 : i64, tpu.core_type = #tpu.core_type<tc>, window_params = [{transform_indices = @transform_0, window_bounds = array<i64: 512, 64>}, {transform_indices = @transform_1, window_bounds = array<i64: 1, 64, 128>}, {transform_indices = @transform_2, window_bounds = array<i64: 1, 128, 4>}, {transform_indices = @transform_3, window_bounds = array<i64: 1, 128, 4>}, {transform_indices = @transform_4, window_bounds = array<i64: 1, 512, 128>}, {transform_indices = @transform_5, window_bounds = array<i64: 1, 512, 4>}, {transform_indices = @transform_6, window_bounds = array<i64: 1, 512, 4>}]} {
    %c0 = arith.constant 0 : index
    %c0_0 = arith.constant 0 : index
    %0 = vector.load %arg2[%c0, %c0_0] : memref<512x64xf32, #tpu.memory_space<vmem>>, vector<512x64xf32>
    %c0_1 = arith.constant 0 : index
    %c0_2 = arith.constant 0 : index
    %c0_3 = arith.constant 0 : index
    %1 = vector.load %arg3[%c0_1, %c0_2, %c0_3] : memref<1x64x128xf32, #tpu.memory_space<vmem>>, vector<1x64x128xf32>
    %2 = vector.shape_cast %1 : vector<1x64x128xf32> to vector<64x128xf32>
    %cst = arith.constant dense<0.000000e+00> : vector<512x128xf32>
    %3 = tpu.matmul %0, %2, %cst {dimension_numbers = #tpu.dot_dimension_numbers<[1], [0], [0], [1], [0, 0, 1, 1], [], []>} : vector<512x64xf32>, vector<64x128xf32>, vector<512x128xf32> -> vector<512x128xf32>
    %4 = arith.truncf %3 : vector<512x128xf32> to vector<512x128xbf16>
    %c0_4 = arith.constant 0 : index
    %c0_5 = arith.constant 0 : index
    %c0_6 = arith.constant 0 : index
    %5 = vector.load %arg6[%c0_4, %c0_5, %c0_6] : memref<1x512x128xbf16, #tpu.memory_space<vmem>>, vector<1x512x128xbf16>
    %6 = vector.shape_cast %5 : vector<1x512x128xbf16> to vector<512x128xbf16>
    %7 = vector.shape_cast %4 : vector<512x128xbf16> to vector<1x512x128xbf16>
    tpu.vector_store %arg6[%c0_4, %c0_5, %c0_6], %7 {strides = array<i32>} : memref<1x512x128xbf16, #tpu.memory_space<vmem>>, vector<1x512x128xbf16>,
    %c0_7 = arith.constant 0 : index
    %c0_8 = arith.constant 0 : index
    %c0_9 = arith.constant 0 : index
    %8 = vector.load %arg4[%c0_7, %c0_8, %c0_9] : memref<1x128x4xf32, #tpu.memory_space<vmem>>, vector<1x128x4xf32>
    %9 = vector.shape_cast %8 : vector<1x128x4xf32> to vector<128x4xf32>
    %cst_10 = arith.constant dense<0.000000e+00> : vector<512x4xf32>
    %10 = tpu.matmul %3, %9, %cst_10 {dimension_numbers = #tpu.dot_dimension_numbers<[1], [0], [0], [1], [0, 0, 1, 1], [], []>} : vector<512x128xf32>, vector<128x4xf32>, vector<512x4xf32> -> vector<512x4xf32>
    %c0_11 = arith.constant 0 : index
    %c0_12 = arith.constant 0 : index
    %c0_13 = arith.constant 0 : index
    %11 = vector.load %arg7[%c0_11, %c0_12, %c0_13] : memref<1x512x4xf32, #tpu.memory_space<vmem>>, vector<1x512x4xf32>
    %12 = vector.shape_cast %11 : vector<1x512x4xf32> to vector<512x4xf32>
    %13 = vector.shape_cast %10 : vector<512x4xf32> to vector<1x512x4xf32>
    tpu.vector_store %arg7[%c0_11, %c0_12, %c0_13], %13 {strides = array<i32>} : memref<1x512x4xf32, #tpu.memory_space<vmem>>, vector<1x512x4xf32>,
    %c0_14 = arith.constant 0 : index
    %c0_15 = arith.constant 0 : index
    %c0_16 = arith.constant 0 : index
    %14 = vector.load %arg5[%c0_14, %c0_15, %c0_16] : memref<1x128x4xf32, #tpu.memory_space<vmem>>, vector<1x128x4xf32>
    %15 = vector.shape_cast %14 : vector<1x128x4xf32> to vector<128x4xf32>
    %cst_17 = arith.constant dense<0.000000e+00> : vector<512x4xf32>
    %16 = tpu.matmul %3, %15, %cst_17 {dimension_numbers = #tpu.dot_dimension_numbers<[1], [0], [0], [1], [0, 0, 1, 1], [], []>} : vector<512x128xf32>, vector<128x4xf32>, vector<512x4xf32> -> vector<512x4xf32>
    %c0_18 = arith.constant 0 : index
    %c0_19 = arith.constant 0 : index
    %c0_20 = arith.constant 0 : index
    %17 = vector.load %arg8[%c0_18, %c0_19, %c0_20] : memref<1x512x4xf32, #tpu.memory_space<vmem>>, vector<1x512x4xf32>
    %18 = vector.shape_cast %17 : vector<1x512x4xf32> to vector<512x4xf32>
    %19 = vector.shape_cast %16 : vector<512x4xf32> to vector<1x512x4xf32>
    tpu.vector_store %arg8[%c0_18, %c0_19, %c0_20], %19 {strides = array<i32>} : memref<1x512x4xf32, #tpu.memory_space<vmem>>, vector<1x512x4xf32>,
    return
  }
  func.func @transform_0(%arg0: i32, %arg1: i32) -> (i32, i32) {
    %c0_i32 = arith.constant 0 : i32
    %c0_i32_0 = arith.constant 0 : i32
    return %arg1, %c0_i32 : i32, i32
  }
  func.func @transform_1(%arg0: i32, %arg1: i32) -> (i32, i32, i32) {
    %c0_i32 = arith.constant 0 : i32
    %c0_i32_0 = arith.constant 0 : i32
    %c0_i32_1 = arith.constant 0 : i32
    return %arg0, %c0_i32, %c0_i32_0 : i32, i32, i32
  }
  func.func @transform_2(%arg0: i32, %arg1: i32) -> (i32, i32, i32) {
    %c0_i32 = arith.constant 0 : i32
    %c0_i32_0 = arith.constant 0 : i32
    %c0_i32_1 = arith.constant 0 : i32
    return %arg0, %c0_i32, %c0_i32_0 : i32, i32, i32
  }
  func.func @transform_3(%arg0: i32, %arg1: i32) -> (i32, i32, i32) {
    %c0_i32 = arith.constant 0 : i32
    %c0_i32_0 = arith.constant 0 : i32
    %c0_i32_1 = arith.constant 0 : i32
    return %arg0, %c0_i32, %c0_i32_0 : i32, i32, i32
  }
  func.func @transform_4(%arg0: i32, %arg1: i32) -> (i32, i32, i32) {
    %c0_i32 = arith.constant 0 : i32
    %c0_i32_0 = arith.constant 0 : i32
    return %arg0, %arg1, %c0_i32 : i32, i32, i32
  }
  func.func @transform_5(%arg0: i32, %arg1: i32) -> (i32, i32, i32) {
    %c0_i32 = arith.constant 0 : i32
    %c0_i32_0 = arith.constant 0 : i32
    return %arg0, %arg1, %c0_i32 : i32, i32, i32
  }
  func.func @transform_6(%arg0: i32, %arg1: i32) -> (i32, i32, i32) {
    %c0_i32 = arith.constant 0 : i32
    %c0_i32_0 = arith.constant 0 : i32
    return %arg0, %arg1, %c0_i32 : i32, i32, i32
  }
}

</mosaic_0001>

<llo_original>
// kernel: tpu_custom_call.1
$region0: #{tpu_custom_call.1}
  #allocation0 [shape = 'u32[]', space=smem, size = 0x4, offset = 0x4, fixed_abs, tag = 'smem constant byte address 0x4 - core index']
  #allocation1 [shape = 'u32[144,128]{1,0:T(1,128)}', space=vmem, size = 0x12000, scoped, tag = 'internal scratch']
  %s0 = inlined_call_operand.vmem [shape: f32[512,64], index: 0, kind: input, shape index: {}]
  %s1 = inlined_call_operand.vmem [shape: f32[2,64,128], index: 1, kind: input, shape index: {}]
  %s2 = inlined_call_operand.vmem [shape: f32[2,128,4], index: 2, kind: input, shape index: {}]
  %s3 = inlined_call_operand.vmem [shape: f32[2,128,4], index: 3, kind: input, shape index: {}]
  %s4 = inlined_call_operand.hbm [shape: bf16[2,512,128], index: 4, kind: output, shape index: {0}]
  %s5 = inlined_call_operand.vmem [shape: f32[2,512,4], index: 5, kind: output, shape index: {1}]
  %s6 = inlined_call_operand.vmem [shape: f32[2,512,4], index: 6, kind: output, shape index: {2}]
  %7 = xla_tuple %s4, %s5, %s6
  %s8 = sld [smem:[#allocation0]]
  $region65: #{tpu_custom_call.1} parent=0
    _
  %s10 = ssub.s32 1, %s8
  %s11 = scalar_select 0, %s10, %s8
  $region1: #{tpu_custom_call.1} parent=0
    #allocation2 [shape = 'u8[262144]{0}', space=vmem, size = 0x40000, scoped, tag = 'output window, operand 0']
    #allocation3 [shape = 's32[2]{0}', space=sflag, size = 0x8, scoped, tag = 'scoped memory for tpu_custom_call.1']
    %12 = vsyncpa [#allocation3], 0
    %s13 = scalar_lea.sflag [#allocation3], 1
    %14 = vsyncpa %s13, 0
    loop: start=0, step=1, limit=4
    $region2: #{tpu_custom_call.1} parent=1 // loop_pre_header
      _
    $region3: #{tpu_custom_call.1} parent=1 // loop_header
      %s16 = sphi 0, %s20
      %p17 = scmp.ge.s32.totalorder %s16, 4
      %s23 = sphi 0, %s35
      %s24 = sphi 0, %s31
      %s25 = sphi 0, %s23
      %s26 = sphi 0, %s24
      %s27 = sphi 0, %s25
      %s28 = sphi 0, %s26
      %s38 = sphi 0, %s40
      %s41 = sphi 0, %s38
      %s42 = sphi 0, %s41
      %s58 = sphi 0, %s42
      %s64 = sphi 0, %s66
      %s67 = sphi 0, %s64
      %s68 = sphi 0, %s67
      %s84 = sphi 0, %s68
      %s90 = sphi 0, %s92
      %s93 = sphi 0, %s90
      %s94 = sphi 0, %s93
      %s110 = sphi 0, %s94
      %s116 = sphi 0, %s118
      %s119 = sphi 0, %s116
      %s120 = sphi 0, %s119
      %s136 = sphi 0, %s120
      %s144 = sphi 0, %s146
      %s147 = sphi 0, %s144
      %s148 = sphi 0, %s147
      %s164 = sphi 0, %s148
      %s172 = sphi 0, %s174
      %s175 = sphi 0, %s172
      %s176 = sphi 0, %s175
      %s192 = sphi 0, %s176
      %s200 = sphi 0, %s202
      %s203 = sphi 0, %s200
      %s204 = sphi 0, %s203
      %s220 = sphi 0, %s204
    $region4: #{tpu_custom_call.1} parent=1 // loop_header_branch
      %19 = sbr.rel (%p17) target = $region8
    $region5: #{tpu_custom_call.1} parent=1 // loop_body
      %s21 = ssub.s32 %s16, 1
      %s22 = ssub.s32 %s16, 2
      %s29 = sadd.s32 1, %s24
      %p30 = scmp.ge.s32.totalorder %s29, 1
      %s31 = scalar_select %p30, 0, %s29
      %s32 = sadd.s32 1, %s23
      %s33 = scalar_select %p30, %s32, %s23
      %p34 = scmp.ge.s32.totalorder %s33, 2
      %s35 = scalar_select %p34, 0, %s33
      %s36 = ssub.s32 %s24, %s31
      %p37 = scmp.eq.s32.totalorder %s36, 0
      %s39 = sadd.s32 %s38, 1
      %s40 = scalar_select %p37, %s38, %s39
      %p43 = pneg %p37
      %p44 = scmp.eq.s32.totalorder %s16, 1
      %p45 = por %p43, %p44
      %p46 = scmp.ne.s32.totalorder %s38, %s41
      %p47 = scmp.eq.s32.totalorder %s16, 0
      %p48 = por %p46, %p47
      %p49 = scmp.ne.s32.totalorder %s38, %s41
      %p50 = scmp.eq.s32.totalorder %s21, 1
      %p51 = por %p49, %p50
      %p52 = scmp.ne.s32.totalorder %s41, %s42
      %p53 = scmp.eq.s32.totalorder %s21, 0
      %p54 = por %p52, %p53
      %p55 = scmp.ne.s32.totalorder %s41, %s42
      %p56 = scmp.eq.s32.totalorder %s22, 1
      %p57 = por %p55, %p56
      %p59 = scmp.ne.s32.totalorder %s42, %s58
      %p60 = scmp.eq.s32.totalorder %s22, 0
      %p61 = por %p59, %p60
      %s62 = ssub.s32 %s23, %s35
      %p63 = scmp.eq.s32.totalorder %s62, 0
      %s65 = sadd.s32 %s64, 1
      %s66 = scalar_select %p63, %s64, %s65
      %p69 = pneg %p63
      %p70 = scmp.eq.s32.totalorder %s16, 1
      %p71 = por %p69, %p70
      %p72 = scmp.ne.s32.totalorder %s64, %s67
      %p73 = scmp.eq.s32.totalorder %s16, 0
      %p74 = por %p72, %p73
      %p75 = scmp.ne.s32.totalorder %s64, %s67
      %p76 = scmp.eq.s32.totalorder %s21, 1
      %p77 = por %p75, %p76
      %p78 = scmp.ne.s32.totalorder %s67, %s68
      %p79 = scmp.eq.s32.totalorder %s21, 0
      %p80 = por %p78, %p79
      %p81 = scmp.ne.s32.totalorder %s67, %s68
      %p82 = scmp.eq.s32.totalorder %s22, 1
      %p83 = por %p81, %p82
      %p85 = scmp.ne.s32.totalorder %s68, %s84
      %p86 = scmp.eq.s32.totalorder %s22, 0
      %p87 = por %p85, %p86
      %s88 = ssub.s32 %s23, %s35
      %p89 = scmp.eq.s32.totalorder %s88, 0
      %s91 = sadd.s32 %s90, 1
      %s92 = scalar_select %p89, %s90, %s91
      %p95 = pneg %p89
      %p96 = scmp.eq.s32.totalorder %s16, 1
      %p97 = por %p95, %p96
      %p98 = scmp.ne.s32.totalorder %s90, %s93
      %p99 = scmp.eq.s32.totalorder %s16, 0
      %p100 = por %p98, %p99
      %p101 = scmp.ne.s32.totalorder %s90, %s93
      %p102 = scmp.eq.s32.totalorder %s21, 1
      %p103 = por %p101, %p102
      %p104 = scmp.ne.s32.totalorder %s93, %s94
      %p105 = scmp.eq.s32.totalorder %s21, 0
      %p106 = por %p104, %p105
      %p107 = scmp.ne.s32.totalorder %s93, %s94
      %p108 = scmp.eq.s32.totalorder %s22, 1
      %p109 = por %p107, %p108
      %p111 = scmp.ne.s32.totalorder %s94, %s110
      %p112 = scmp.eq.s32.totalorder %s22, 0
      %p113 = por %p111, %p112
      %s114 = ssub.s32 %s23, %s35
      %p115 = scmp.eq.s32.totalorder %s114, 0
      %s117 = sadd.s32 %s116, 1
      %s118 = scalar_select %p115, %s116, %s117
      %p121 = pneg %p115
      %p122 = scmp.eq.s32.totalorder %s16, 1
      %p123 = por %p121, %p122
      %p124 = scmp.ne.s32.totalorder %s116, %s119
      %p125 = scmp.eq.s32.totalorder %s16, 0
      %p126 = por %p124, %p125
      %p127 = scmp.ne.s32.totalorder %s116, %s119
      %p128 = scmp.eq.s32.totalorder %s21, 1
      %p129 = por %p127, %p128
      %p130 = scmp.ne.s32.totalorder %s119, %s120
      %p131 = scmp.eq.s32.totalorder %s21, 0
      %p132 = por %p130, %p131
      %p133 = scmp.ne.s32.totalorder %s119, %s120
      %p134 = scmp.eq.s32.totalorder %s22, 1
      %p135 = por %p133, %p134
      %p137 = scmp.ne.s32.totalorder %s120, %s136
      %p138 = scmp.eq.s32.totalorder %s22, 0
      %p139 = por %p137, %p138
      %s140 = ssub.s32 %s23, %s35
      %s141 = ssub.s32 %s24, %s31
      %s142 = sor.u32 %s140, %s141
      %p143 = scmp.eq.s32.totalorder %s142, 0
      %s145 = sadd.s32 %s144, 1
      %s146 = scalar_select %p143, %s144, %s145
      %p149 = pneg %p143
      %p150 = scmp.eq.s32.totalorder %s16, 1
      %p151 = por %p149, %p150
      %p152 = scmp.ne.s32.totalorder %s144, %s147
      %p153 = scmp.eq.s32.totalorder %s16, 0
      %p154 = por %p152, %p153
      %p155 = scmp.ne.s32.totalorder %s144, %s147
      %p156 = scmp.eq.s32.totalorder %s21, 1
      %p157 = por %p155, %p156
      %p158 = scmp.ne.s32.totalorder %s147, %s148
      %p159 = scmp.eq.s32.totalorder %s21, 0
      %p160 = por %p158, %p159
      %p161 = scmp.ne.s32.totalorder %s147, %s148
      %p162 = scmp.eq.s32.totalorder %s22, 1
      %p163 = por %p161, %p162
      %p165 = scmp.ne.s32.totalorder %s148, %s164
      %p166 = scmp.eq.s32.totalorder %s22, 0
      %p167 = por %p165, %p166
      %s168 = ssub.s32 %s23, %s35
      %s169 = ssub.s32 %s24, %s31
      %s170 = sor.u32 %s168, %s169
      %p171 = scmp.eq.s32.totalorder %s170, 0
      %s173 = sadd.s32 %s172, 1
      %s174 = scalar_select %p171, %s172, %s173
      %p177 = pneg %p171
      %p178 = scmp.eq.s32.totalorder %s16, 1
      %p179 = por %p177, %p178
      %p180 = scmp.ne.s32.totalorder %s172, %s175
      %p181 = scmp.eq.s32.totalorder %s16, 0
      %p182 = por %p180, %p181
      %p183 = scmp.ne.s32.totalorder %s172, %s175
      %p184 = scmp.eq.s32.totalorder %s21, 1
      %p185 = por %p183, %p184
      %p186 = scmp.ne.s32.totalorder %s175, %s176
      %p187 = scmp.eq.s32.totalorder %s21, 0
      %p188 = por %p186, %p187
      %p189 = scmp.ne.s32.totalorder %s175, %s176
      %p190 = scmp.eq.s32.totalorder %s22, 1
      %p191 = por %p189, %p190
      %p193 = scmp.ne.s32.totalorder %s176, %s192
      %p194 = scmp.eq.s32.totalorder %s22, 0
      %p195 = por %p193, %p194
      %s196 = ssub.s32 %s23, %s35
      %s197 = ssub.s32 %s24, %s31
      %s198 = sor.u32 %s196, %s197
      %p199 = scmp.eq.s32.totalorder %s198, 0
      %s201 = sadd.s32 %s200, 1
      %s202 = scalar_select %p199, %s200, %s201
      %p205 = pneg %p199
      %p206 = scmp.eq.s32.totalorder %s16, 1
      %p207 = por %p205, %p206
      %p208 = scmp.ne.s32.totalorder %s200, %s203
      %p209 = scmp.eq.s32.totalorder %s16, 0
      %p210 = por %p208, %p209
      %p211 = scmp.ne.s32.totalorder %s200, %s203
      %p212 = scmp.eq.s32.totalorder %s21, 1
      %p213 = por %p211, %p212
      %p214 = scmp.ne.s32.totalorder %s203, %s204
      %p215 = scmp.eq.s32.totalorder %s21, 0
      %p216 = por %p214, %p215
      %p217 = scmp.ne.s32.totalorder %s203, %s204
      %p218 = scmp.eq.s32.totalorder %s22, 1
      %p219 = por %p217, %p218
      %p221 = scmp.ne.s32.totalorder %s204, %s220
      %p222 = scmp.eq.s32.totalorder %s22, 0
      %p223 = por %p221, %p222
      %p224 = scmp.le.s32.totalorder 1, %s16
      %p225 = scmp.lt.s32.totalorder %s16, 3
      %p226 = pnand %p224, %p225
      %p227 = pneg %p226
      // Predicated region
      $region9: #{tpu_custom_call.1} parent=5 // pred_check
        _
      $region10: #{tpu_custom_call.1} parent=5 // pred_check_branch
        %229 = sbr.rel (%p226) target = $region12
      $region11: #{tpu_custom_call.1} parent=5 // pred_region
        %s230 = ssub.s32 %s16, 1
        // Predicated region
        $region13: #{tpu_custom_call.1} parent=11 // pred_check
          %p231 = pneg %p54
        $region14: #{tpu_custom_call.1} parent=11 // pred_check_branch
          %233 = sbr.rel (%p231) target = $region16
        $region15: #{tpu_custom_call.1} parent=11 // pred_region
          %s234 = smul.u32 64, %s26
          %p235 = scmp.lt.s32.totalorder %s234, 63
          %s236 = scalar_select %p235, %s234, 63
          %s237 = smul.addr %s236, 8
          %s238 = scalar_lea.vmem %s0, %s237
          %s239 = smul.u32 64, %s26
        $region16: #{tpu_custom_call.1} parent=11 // pred_fallthru
          _
      $region12: #{tpu_custom_call.1} parent=5 // pred_fallthru
        _
      %p240 = scmp.lt.s32.totalorder %s16, 2
      // Predicated region
      $region17: #{tpu_custom_call.1} parent=5 // pred_check
        %p241 = pneg %p240
      $region18: #{tpu_custom_call.1} parent=5 // pred_check_branch
        %243 = sbr.rel (%p241) target = $region20
      $region19: #{tpu_custom_call.1} parent=5 // pred_region
        // Predicated region
        $region21: #{tpu_custom_call.1} parent=19 // pred_check
          %p244 = pneg %p74
        $region22: #{tpu_custom_call.1} parent=19 // pred_check_branch
          %246 = sbr.rel (%p244) target = $region24
        $region23: #{tpu_custom_call.1} parent=19 // pred_region
          %p247 = scmp.lt.s32.totalorder %s23, 1
          %s248 = scalar_select %p247, %s23, 1
          %s249 = smul.addr %s248, 8
          %s250 = smul.addr %s249, 8
          %s251 = scalar_lea.vmem %s1, %s250
        $region24: #{tpu_custom_call.1} parent=19 // pred_fallthru
          _
        // Predicated region
        $region25: #{tpu_custom_call.1} parent=19 // pred_check
          %p252 = pneg %p100
        $region26: #{tpu_custom_call.1} parent=19 // pred_check_branch
          %254 = sbr.rel (%p252) target = $region28
        $region27: #{tpu_custom_call.1} parent=19 // pred_region
          %p255 = scmp.lt.s32.totalorder %s23, 1
          %s256 = scalar_select %p255, %s23, 1
          %s257 = smul.addr %s256, 16
          %s258 = smul.addr %s257, 8
          %s259 = scalar_lea.vmem %s2, %s258
        $region28: #{tpu_custom_call.1} parent=19 // pred_fallthru
          _
        // Predicated region
        $region29: #{tpu_custom_call.1} parent=19 // pred_check
          %p260 = pneg %p126
        $region30: #{tpu_custom_call.1} parent=19 // pred_check_branch
          %262 = sbr.rel (%p260) target = $region32
        $region31: #{tpu_custom_call.1} parent=19 // pred_region
          %p263 = scmp.lt.s32.totalorder %s23, 1
          %s264 = scalar_select %p263, %s23, 1
          %s265 = smul.addr %s264, 16
          %s266 = smul.addr %s265, 8
          %s267 = scalar_lea.vmem %s3, %s266
        $region32: #{tpu_custom_call.1} parent=19 // pred_fallthru
          _
      $region20: #{tpu_custom_call.1} parent=5 // pred_fallthru
        _
      %p268 = scmp.le.s32.totalorder 1, %s16
      %p269 = scmp.lt.s32.totalorder %s16, 3
      %p270 = pnand %p268, %p269
      %p271 = pneg %p270
      // Predicated region
      $region33: #{tpu_custom_call.1} parent=5 // pred_check
        _
      $region34: #{tpu_custom_call.1} parent=5 // pred_check_branch
        %273 = sbr.rel (%p270) target = $region36
      $region35: #{tpu_custom_call.1} parent=5 // pred_region
        %s274 = ssub.s32 %s16, 1
        %s275 = smul.u32 64, %s26
        %p276 = scmp.lt.s32.totalorder %s275, 63
        %s277 = scalar_select %p276, %s275, 63
        %s278 = smul.addr %s277, 8
        %s279 = scalar_lea.vmem %s0, %s278
        %p280 = pneg %p54
        %p281 = pneg %p51
        %p282 = scmp.lt.s32.totalorder %s25, 1
        %s283 = scalar_select %p282, %s25, 1
        %s284 = smul.addr %s283, 8
        %s285 = smul.addr %s284, 8
        %s286 = scalar_lea.vmem %s1, %s285
        %p287 = pneg %p80
        %p288 = pneg %p77
        %p289 = scmp.lt.s32.totalorder %s25, 1
        %s290 = scalar_select %p289, %s25, 1
        %s291 = smul.addr %s290, 16
        %s292 = smul.addr %s291, 8
        %s293 = scalar_lea.vmem %s2, %s292
        %p294 = pneg %p106
        %p295 = pneg %p103
        %p296 = scmp.lt.s32.totalorder %s25, 1
        %s297 = scalar_select %p296, %s25, 1
        %s298 = smul.addr %s297, 16
        %s299 = smul.addr %s298, 8
        %s300 = scalar_lea.vmem %s3, %s299
        %p301 = pneg %p132
        %p302 = pneg %p129
        %p303 = pneg %p160
        %p304 = pneg %p157
        %s305 = sand.u32 %s147, 1
        %s306 = scalar_lea.sflag [#allocation3], %s305
        %s307 = sand.u32 %s147, 1
        %s308 = smul.addr %s307, 256
        %s309 = scalar_lea.vmem [#allocation2], %s308
        %p310 = pneg %p188
        %p311 = pneg %p185
        %s312 = smul.u32 64, %s26
        %p313 = scmp.lt.s32.totalorder %s25, 1
        %s314 = scalar_select %p313, %s25, 1
        %p315 = scmp.lt.s32.totalorder %s312, 63
        %s316 = scalar_select %p315, %s312, 63
        %s317 = smul.addr %s314, 64
        %s318 = sadd.s32 %s316, %s317
        %s319 = smul.addr %s318, 8
        %s320 = scalar_lea.vmem %s5, %s319
        %p321 = pneg %p216
        %p322 = pneg %p213
        %s323 = smul.u32 64, %s26
        %p324 = scmp.lt.s32.totalorder %s25, 1
        %s325 = scalar_select %p324, %s25, 1
        %p326 = scmp.lt.s32.totalorder %s323, 63
        %s327 = scalar_select %p326, %s323, 63
        %s328 = smul.addr %s325, 64
        %s329 = sadd.s32 %s327, %s328
        %s330 = smul.addr %s329, 8
        %s331 = scalar_lea.vmem %s6, %s330
        %s332 = smul.u32 64, %s26
        %p333 = scmp.lt.s32.totalorder %s332, 63
        %s334 = scalar_select %p333, %s332, 63
        %s335 = smul.addr %s334, 8
        %s336 = scalar_lea.vmem %s0, %s335
        %s337 = smul.u32 64, %s26
        %p338 = scmp.lt.s32.totalorder %s25, 1
        %s339 = scalar_select %p338, %s25, 1
        %s340 = smul.addr %s339, 8
        %s341 = smul.addr %s340, 8
        %s342 = scalar_lea.vmem %s1, %s341
        %p343 = scmp.lt.s32.totalorder %s25, 1
        %s344 = scalar_select %p343, %s25, 1
        %s345 = smul.addr %s344, 16
        %s346 = smul.addr %s345, 8
        %s347 = scalar_lea.vmem %s2, %s346
        %p348 = scmp.lt.s32.totalorder %s25, 1
        %s349 = scalar_select %p348, %s25, 1
        %s350 = smul.addr %s349, 16
        %s351 = smul.addr %s350, 8
        %s352 = scalar_lea.vmem %s3, %s351
        %s353 = smul.u32 64, %s26
        %s354 = smul.u32 64, %s26
        %p355 = scmp.lt.s32.totalorder %s25, 1
        %s356 = scalar_select %p355, %s25, 1
        %p357 = scmp.lt.s32.totalorder %s354, 63
        %s358 = scalar_select %p357, %s354, 63
        %s359 = smul.addr %s356, 64
        %s360 = sadd.s32 %s358, %s359
        %s361 = smul.addr %s360, 8
        %s362 = scalar_lea.vmem %s5, %s361
        %s363 = smul.u32 64, %s26
        %s364 = smul.u32 64, %s26
        %p365 = scmp.lt.s32.totalorder %s25, 1
        %s366 = scalar_select %p365, %s25, 1
        %p367 = scmp.lt.s32.totalorder %s364, 63
        %s368 = scalar_select %p367, %s364, 63
        %s369 = smul.addr %s366, 64
        %s370 = sadd.s32 %s368, %s369
        %s371 = smul.addr %s370, 8
        %s372 = scalar_lea.vmem %s6, %s371
        %s373 = smul.u32 64, %s26
        %v374 = vld [vmem:[%s336] sm:$0xff]
        %v375 = vld [vmem:[%s336 + $0x8] sm:$0xff]
        %v376 = vld [vmem:[%s336 + $0x10] sm:$0xff]
        %v377 = vld [vmem:[%s336 + $0x18] sm:$0xff]
        %v378 = vld [vmem:[%s336 + $0x20] sm:$0xff]
        %v379 = vld [vmem:[%s336 + $0x28] sm:$0xff]
        %v380 = vld [vmem:[%s336 + $0x30] sm:$0xff]
        %v381 = vld [vmem:[%s336 + $0x38] sm:$0xff]
        %v382 = vld [vmem:[%s336 + $0x40] sm:$0xff]
        %v383 = vld [vmem:[%s336 + $0x48] sm:$0xff]
        %v384 = vld [vmem:[%s336 + $0x50] sm:$0xff]
        %v385 = vld [vmem:[%s336 + $0x58] sm:$0xff]
        %v386 = vld [vmem:[%s336 + $0x60] sm:$0xff]
        %v387 = vld [vmem:[%s336 + $0x68] sm:$0xff]
        %v388 = vld [vmem:[%s336 + $0x70] sm:$0xff]
        %v389 = vld [vmem:[%s336 + $0x78] sm:$0xff]
        %v390 = vld [vmem:[%s336 + $0x80] sm:$0xff]
        %v391 = vld [vmem:[%s336 + $0x88] sm:$0xff]
        %v392 = vld [vmem:[%s336 + $0x90] sm:$0xff]
        %v393 = vld [vmem:[%s336 + $0x98] sm:$0xff]
        %v394 = vld [vmem:[%s336 + $0xa0] sm:$0xff]
        %v395 = vld [vmem:[%s336 + $0xa8] sm:$0xff]
        %v396 = vld [vmem:[%s336 + $0xb0] sm:$0xff]
        %v397 = vld [vmem:[%s336 + $0xb8] sm:$0xff]
        %v398 = vld [vmem:[%s336 + $0xc0] sm:$0xff]
        %v399 = vld [vmem:[%s336 + $0xc8] sm:$0xff]
        %v400 = vld [vmem:[%s336 + $0xd0] sm:$0xff]
        %v401 = vld [vmem:[%s336 + $0xd8] sm:$0xff]
        %v402 = vld [vmem:[%s336 + $0xe0] sm:$0xff]
        %v403 = vld [vmem:[%s336 + $0xe8] sm:$0xff]
        %v404 = vld [vmem:[%s336 + $0xf0] sm:$0xff]
        %v405 = vld [vmem:[%s336 + $0xf8] sm:$0xff]
        %v406 = vld [vmem:[%s336 + $0x100] sm:$0xff]
        %v407 = vld [vmem:[%s336 + $0x108] sm:$0xff]
        %v408 = vld [vmem:[%s336 + $0x110] sm:$0xff]
        %v409 = vld [vmem:[%s336 + $0x118] sm:$0xff]
        %v410 = vld [vmem:[%s336 + $0x120] sm:$0xff]
        %v411 = vld [vmem:[%s336 + $0x128] sm:$0xff]
        %v412 = vld [vmem:[%s336 + $0x130] sm:$0xff]
        %v413 = vld [vmem:[%s336 + $0x138] sm:$0xff]
        %v414 = vld [vmem:[%s336 + $0x140] sm:$0xff]
        %v415 = vld [vmem:[%s336 + $0x148] sm:$0xff]
        %v416 = vld [vmem:[%s336 + $0x150] sm:$0xff]
        %v417 = vld [vmem:[%s336 + $0x158] sm:$0xff]
        %v418 = vld [vmem:[%s336 + $0x160] sm:$0xff]
        %v419 = vld [vmem:[%s336 + $0x168] sm:$0xff]
        %v420 = vld [vmem:[%s336 + $0x170] sm:$0xff]
        %v421 = vld [vmem:[%s336 + $0x178] sm:$0xff]
        %v422 = vld [vmem:[%s336 + $0x180] sm:$0xff]
        %v423 = vld [vmem:[%s336 + $0x188] sm:$0xff]
        %v424 = vld [vmem:[%s336 + $0x190] sm:$0xff]
        %v425 = vld [vmem:[%s336 + $0x198] sm:$0xff]
        %v426 = vld [vmem:[%s336 + $0x1a0] sm:$0xff]
        %v427 = vld [vmem:[%s336 + $0x1a8] sm:$0xff]
        %v428 = vld [vmem:[%s336 + $0x1b0] sm:$0xff]
        %v429 = vld [vmem:[%s336 + $0x1b8] sm:$0xff]
        %v430 = vld [vmem:[%s336 + $0x1c0] sm:$0xff]
        %v431 = vld [vmem:[%s336 + $0x1c8] sm:$0xff]
        %v432 = vld [vmem:[%s336 + $0x1d0] sm:$0xff]
        %v433 = vld [vmem:[%s336 + $0x1d8] sm:$0xff]
        %v434 = vld [vmem:[%s336 + $0x1e0] sm:$0xff]
        %v435 = vld [vmem:[%s336 + $0x1e8] sm:$0xff]
        %v436 = vld [vmem:[%s336 + $0x1f0] sm:$0xff]
        %v437 = vld [vmem:[%s336 + $0x1f8] sm:$0xff]
        %v438 = vld [vmem:[%s342] sm:$0xff]
        %v439 = vld [vmem:[%s342 + $0x8] sm:$0xff]
        %v440 = vld [vmem:[%s342 + $0x10] sm:$0xff]
        %v441 = vld [vmem:[%s342 + $0x18] sm:$0xff]
        %v442 = vld [vmem:[%s342 + $0x20] sm:$0xff]
        %v443 = vld [vmem:[%s342 + $0x28] sm:$0xff]
        %v444 = vld [vmem:[%s342 + $0x30] sm:$0xff]
        %v445 = vld [vmem:[%s342 + $0x38] sm:$0xff]
        %vm446 = vcmask 523264
        %v448 = vsel %vm446, %v374, 0
        %v451 = vsel %vm446, %v375, 0
        %v454 = vsel %vm446, %v376, 0
        %v457 = vsel %vm446, %v377, 0
        %v460 = vsel %vm446, %v378, 0
        %v463 = vsel %vm446, %v379, 0
        %v466 = vsel %vm446, %v380, 0
        %v469 = vsel %vm446, %v381, 0
        %v472 = vsel %vm446, %v382, 0
        %v475 = vsel %vm446, %v383, 0
        %v478 = vsel %vm446, %v384, 0
        %v481 = vsel %vm446, %v385, 0
        %v484 = vsel %vm446, %v386, 0
        %v487 = vsel %vm446, %v387, 0
        %v490 = vsel %vm446, %v388, 0
        %v493 = vsel %vm446, %v389, 0
        %v496 = vsel %vm446, %v390, 0
        %v499 = vsel %vm446, %v391, 0
        %v502 = vsel %vm446, %v392, 0
        %v505 = vsel %vm446, %v393, 0
        %v508 = vsel %vm446, %v394, 0
        %v511 = vsel %vm446, %v395, 0
        %v514 = vsel %vm446, %v396, 0
        %v517 = vsel %vm446, %v397, 0
        %v520 = vsel %vm446, %v398, 0
        %v523 = vsel %vm446, %v399, 0
        %v526 = vsel %vm446, %v400, 0
        %v529 = vsel %vm446, %v401, 0
        %v532 = vsel %vm446, %v402, 0
        %v535 = vsel %vm446, %v403, 0
        %v538 = vsel %vm446, %v404, 0
        %v541 = vsel %vm446, %v405, 0
        %v544 = vsel %vm446, %v406, 0
        %v547 = vsel %vm446, %v407, 0
        %v550 = vsel %vm446, %v408, 0
        %v553 = vsel %vm446, %v409, 0
        %v556 = vsel %vm446, %v410, 0
        %v559 = vsel %vm446, %v411, 0
        %v562 = vsel %vm446, %v412, 0
        %v565 = vsel %vm446, %v413, 0
        %v568 = vsel %vm446, %v414, 0
        %v571 = vsel %vm446, %v415, 0
        %v574 = vsel %vm446, %v416, 0
        %v577 = vsel %vm446, %v417, 0
        %v580 = vsel %vm446, %v418, 0
        %v583 = vsel %vm446, %v419, 0
        %v586 = vsel %vm446, %v420, 0
        %v589 = vsel %vm446, %v421, 0
        %v592 = vsel %vm446, %v422, 0
        %v595 = vsel %vm446, %v423, 0
        %v598 = vsel %vm446, %v424, 0
        %v601 = vsel %vm446, %v425, 0
        %v604 = vsel %vm446, %v426, 0
        %v607 = vsel %vm446, %v427, 0
        %v610 = vsel %vm446, %v428, 0
        %v613 = vsel %vm446, %v429, 0
        %v616 = vsel %vm446, %v430, 0
        %v619 = vsel %vm446, %v431, 0
        %v622 = vsel %vm446, %v432, 0
        %v625 = vsel %vm446, %v433, 0
        %v628 = vsel %vm446, %v434, 0
        %v631 = vsel %vm446, %v435, 0
        %v634 = vsel %vm446, %v436, 0
        %v637 = vsel %vm446, %v437, 0
        %639 = vmatprep.subr.mxu0 0.0
        %640 = vmatpush1.msra.mxu0 0.0
        %641 = vmatprep.subr.mxu0 0.0
        %642 = vmatpush1.msra.mxu0 0.0
        %643 = vmatprep.subr.mxu0 0.0
        %644 = vmatpush1.msra.mxu0 0.0
        %645 = vmatprep.subr.mxu0 0.0
        %646 = vmatpush1.msra.mxu0 0.0
        %647 = vmatprep.subr.mxu0 0.0
        %648 = vmatpush1.msra.mxu0 0.0
        %649 = vmatprep.subr.mxu0 0.0
        %650 = vmatpush1.msra.mxu0 0.0
        %651 = vmatprep.subr.mxu0 0.0
        %652 = vmatpush1.msra.mxu0 0.0
        %653 = vmatprep.subr.mxu0 0.0
        %654 = vmatpush1.msra.mxu0 0.0
        %655 = vmatprep.subr.mxu0 0.0
        %656 = vmatpush1.msra.mxu0 %v445
        %657 = vmatprep.subr.mxu0 0.0
        %658 = vmatpush1.msra.mxu0 %v444
        %659 = vmatprep.subr.mxu0 0.0
        %660 = vmatpush1.msra.mxu0 %v443
        %661 = vmatprep.subr.mxu0 0.0
        %662 = vmatpush1.msra.mxu0 %v442
        %663 = vmatprep.subr.mxu0 0.0
        %664 = vmatpush1.msra.mxu0 %v441
        %665 = vmatprep.subr.mxu0 0.0
        %666 = vmatpush1.msra.mxu0 %v440
        %667 = vmatprep.subr.mxu0 0.0
        %668 = vmatpush1.msra.mxu0 %v439
        %669 = vmatprep.subr.mxu0 0.0
        %670 = vmatpush1.msra.mxu0 %v438
        %671 = vmatprep.subr.mxu0 0.0
        %672 = vmatpush2.msra.mxu0 0.0
        %673 = vmatprep.subr.mxu0 0.0
        %674 = vmatpush2.msra.mxu0 0.0
        %675 = vmatprep.subr.mxu0 0.0
        %676 = vmatpush2.msra.mxu0 0.0
        %677 = vmatprep.subr.mxu0 0.0
        %678 = vmatpush2.msra.mxu0 0.0
        %679 = vmatprep.subr.mxu0 0.0
        %680 = vmatpush2.msra.mxu0 0.0
        %681 = vmatprep.subr.mxu0 0.0
        %682 = vmatpush2.msra.mxu0 0.0
        %683 = vmatprep.subr.mxu0 0.0
        %684 = vmatpush2.msra.mxu0 0.0
        %685 = vmatprep.subr.mxu0 0.0
        %686 = vmatpush2.msra.mxu0 0.0
        %687 = vmatprep.subr.mxu0 0.0
        %688 = vmatpush2.msra.mxu0 0.0
        %689 = vmatprep.subr.mxu0 0.0
        %690 = vmatpush2.msra.mxu0 0.0
        %691 = vmatprep.subr.mxu0 0.0
        %692 = vmatpush2.msra.mxu0 0.0
        %693 = vmatprep.subr.mxu0 0.0
        %694 = vmatpush2.msra.mxu0 0.0
        %695 = vmatprep.subr.mxu0 0.0
        %696 = vmatpush2.msra.mxu0 0.0
        %697 = vmatprep.subr.mxu0 0.0
        %698 = vmatpush2.msra.mxu0 0.0
        %699 = vmatprep.subr.mxu0 0.0
        %700 = vmatpush2.msra.mxu0 0.0
        %701 = vmatprep.subr.mxu0 0.0
        %702 = vmatpush2.msra.mxu0 0.0
        %703 = vmatprep.mubr.f32.mxu0 0.0
        %704 = vmatmul.mubr.f32.gmra.mxu0 %v448
        %v705 = vpop.f32.mrf.mxu0
        %v706 = vadd.f32 0.0, %v705
        %v707 = vpop.f32.mrf.mxu0
        %708 = vmatprep.mubr.f32.mxu0 0.0
        %709 = vmatmul.mubr.f32.gmra.mxu0 %v451
        %v710 = vpop.f32.mrf.mxu0
        %v711 = vadd.f32 0.0, %v710
        %v712 = vpop.f32.mrf.mxu0
        %713 = vmatprep.mubr.f32.mxu0 0.0
        %714 = vmatmul.mubr.f32.gmra.mxu0 %v454
        %v715 = vpop.f32.mrf.mxu0
        %v716 = vadd.f32 0.0, %v715
        %v717 = vpop.f32.mrf.mxu0
        %718 = vmatprep.mubr.f32.mxu0 0.0
        %719 = vmatmul.mubr.f32.gmra.mxu0 %v457
        %v720 = vpop.f32.mrf.mxu0
        %v721 = vadd.f32 0.0, %v720
        %v722 = vpop.f32.mrf.mxu0
        %723 = vmatprep.mubr.f32.mxu0 0.0
        %724 = vmatmul.mubr.f32.gmra.mxu0 %v460
        %v725 = vpop.f32.mrf.mxu0
        %v726 = vadd.f32 0.0, %v725
        %v727 = vpop.f32.mrf.mxu0
        %728 = vmatprep.mubr.f32.mxu0 0.0
        %729 = vmatmul.mubr.f32.gmra.mxu0 %v463
        %v730 = vpop.f32.mrf.mxu0
        %v731 = vadd.f32 0.0, %v730
        %v732 = vpop.f32.mrf.mxu0
        %733 = vmatprep.mubr.f32.mxu0 0.0
        %734 = vmatmul.mubr.f32.gmra.mxu0 %v466
        %v735 = vpop.f32.mrf.mxu0
        %v736 = vadd.f32 0.0, %v735
        %v737 = vpop.f32.mrf.mxu0
        %738 = vmatprep.mubr.f32.mxu0 0.0
        %739 = vmatmul.mubr.f32.gmra.mxu0 %v469
        %v740 = vpop.f32.mrf.mxu0
        %v741 = vadd.f32 0.0, %v740
        %v742 = vpop.f32.mrf.mxu0
        %743 = vmatprep.mubr.f32.mxu0 0.0
        %744 = vmatmul.mubr.f32.gmra.mxu0 %v472
        %v745 = vpop.f32.mrf.mxu0
        %v746 = vadd.f32 0.0, %v745
        %v747 = vpop.f32.mrf.mxu0
        %748 = vmatprep.mubr.f32.mxu0 0.0
        %749 = vmatmul.mubr.f32.gmra.mxu0 %v475
        %v750 = vpop.f32.mrf.mxu0
        %v751 = vadd.f32 0.0, %v750
        %v752 = vpop.f32.mrf.mxu0
        %753 = vmatprep.mubr.f32.mxu0 0.0
        %754 = vmatmul.mubr.f32.gmra.mxu0 %v478
        %v755 = vpop.f32.mrf.mxu0
        %v756 = vadd.f32 0.0, %v755
        %v757 = vpop.f32.mrf.mxu0
        %758 = vmatprep.mubr.f32.mxu0 0.0
        %759 = vmatmul.mubr.f32.gmra.mxu0 %v481
        %v760 = vpop.f32.mrf.mxu0
        %v761 = vadd.f32 0.0, %v760
        %v762 = vpop.f32.mrf.mxu0
        %763 = vmatprep.mubr.f32.mxu0 0.0
        %764 = vmatmul.mubr.f32.gmra.mxu0 %v484
        %v765 = vpop.f32.mrf.mxu0
        %v766 = vadd.f32 0.0, %v765
        %v767 = vpop.f32.mrf.mxu0
        %768 = vmatprep.mubr.f32.mxu0 0.0
        %769 = vmatmul.mubr.f32.gmra.mxu0 %v487
        %v770 = vpop.f32.mrf.mxu0
        %v771 = vadd.f32 0.0, %v770
        %v772 = vpop.f32.mrf.mxu0
        %773 = vmatprep.mubr.f32.mxu0 0.0
        %774 = vmatmul.mubr.f32.gmra.mxu0 %v490
        %v775 = vpop.f32.mrf.mxu0
        %v776 = vadd.f32 0.0, %v775
        %v777 = vpop.f32.mrf.mxu0
        %778 = vmatprep.mubr.f32.mxu0 0.0
        %779 = vmatmul.mubr.f32.gmra.mxu0 %v493
        %v780 = vpop.f32.mrf.mxu0
        %v781 = vadd.f32 0.0, %v780
        %v782 = vpop.f32.mrf.mxu0
        %783 = vmatprep.mubr.f32.mxu0 0.0
        %784 = vmatmul.mubr.f32.gmra.mxu0 %v496
        %v785 = vpop.f32.mrf.mxu0
        %v786 = vadd.f32 0.0, %v785
        %v787 = vpop.f32.mrf.mxu0
        %788 = vmatprep.mubr.f32.mxu0 0.0
        %789 = vmatmul.mubr.f32.gmra.mxu0 %v499
        %v790 = vpop.f32.mrf.mxu0
        %v791 = vadd.f32 0.0, %v790
        %v792 = vpop.f32.mrf.mxu0
        %793 = vmatprep.mubr.f32.mxu0 0.0
        %794 = vmatmul.mubr.f32.gmra.mxu0 %v502
        %v795 = vpop.f32.mrf.mxu0
        %v796 = vadd.f32 0.0, %v795
        %v797 = vpop.f32.mrf.mxu0
        %798 = vmatprep.mubr.f32.mxu0 0.0
        %799 = vmatmul.mubr.f32.gmra.mxu0 %v505
        %v800 = vpop.f32.mrf.mxu0
        %v801 = vadd.f32 0.0, %v800
        %v802 = vpop.f32.mrf.mxu0
        %803 = vmatprep.mubr.f32.mxu0 0.0
        %804 = vmatmul.mubr.f32.gmra.mxu0 %v508
        %v805 = vpop.f32.mrf.mxu0
        %v806 = vadd.f32 0.0, %v805
        %v807 = vpop.f32.mrf.mxu0
        %808 = vmatprep.mubr.f32.mxu0 0.0
        %809 = vmatmul.mubr.f32.gmra.mxu0 %v511
        %v810 = vpop.f32.mrf.mxu0
        %v811 = vadd.f32 0.0, %v810
        %v812 = vpop.f32.mrf.mxu0
        %813 = vmatprep.mubr.f32.mxu0 0.0
        %814 = vmatmul.mubr.f32.gmra.mxu0 %v514
        %v815 = vpop.f32.mrf.mxu0
        %v816 = vadd.f32 0.0, %v815
        %v817 = vpop.f32.mrf.mxu0
        %818 = vmatprep.mubr.f32.mxu0 0.0
        %819 = vmatmul.mubr.f32.gmra.mxu0 %v517
        %v820 = vpop.f32.mrf.mxu0
        %v821 = vadd.f32 0.0, %v820
        %v822 = vpop.f32.mrf.mxu0
        %823 = vmatprep.mubr.f32.mxu0 0.0
        %824 = vmatmul.mubr.f32.gmra.mxu0 %v520
        %v825 = vpop.f32.mrf.mxu0
        %v826 = vadd.f32 0.0, %v825
        %v827 = vpop.f32.mrf.mxu0
        %828 = vmatprep.mubr.f32.mxu0 0.0
        %829 = vmatmul.mubr.f32.gmra.mxu0 %v523
        %v830 = vpop.f32.mrf.mxu0
        %v831 = vadd.f32 0.0, %v830
        %v832 = vpop.f32.mrf.mxu0
        %833 = vmatprep.mubr.f32.mxu0 0.0
        %834 = vmatmul.mubr.f32.gmra.mxu0 %v526
        %v835 = vpop.f32.mrf.mxu0
        %v836 = vadd.f32 0.0, %v835
        %v837 = vpop.f32.mrf.mxu0
        %838 = vmatprep.mubr.f32.mxu0 0.0
        %839 = vmatmul.mubr.f32.gmra.mxu0 %v529
        %v840 = vpop.f32.mrf.mxu0
        %v841 = vadd.f32 0.0, %v840
        %v842 = vpop.f32.mrf.mxu0
        %843 = vmatprep.mubr.f32.mxu0 0.0
        %844 = vmatmul.mubr.f32.gmra.mxu0 %v532
        %v845 = vpop.f32.mrf.mxu0
        %v846 = vadd.f32 0.0, %v845
        %v847 = vpop.f32.mrf.mxu0
        %848 = vmatprep.mubr.f32.mxu0 0.0
        %849 = vmatmul.mubr.f32.gmra.mxu0 %v535
        %v850 = vpop.f32.mrf.mxu0
        %v851 = vadd.f32 0.0, %v850
        %v852 = vpop.f32.mrf.mxu0
        %853 = vmatprep.mubr.f32.mxu0 0.0
        %854 = vmatmul.mubr.f32.gmra.mxu0 %v538
        %v855 = vpop.f32.mrf.mxu0
        %v856 = vadd.f32 0.0, %v855
        %v857 = vpop.f32.mrf.mxu0
        %858 = vmatprep.mubr.f32.mxu0 0.0
        %859 = vmatmul.mubr.f32.gmra.mxu0 %v541
        %v860 = vpop.f32.mrf.mxu0
        %v861 = vadd.f32 0.0, %v860
        %v862 = vpop.f32.mrf.mxu0
        %863 = vmatprep.mubr.f32.mxu0 0.0
        %864 = vmatmul.mubr.f32.gmra.mxu0 %v544
        %v865 = vpop.f32.mrf.mxu0
        %v866 = vadd.f32 0.0, %v865
        %v867 = vpop.f32.mrf.mxu0
        %868 = vmatprep.mubr.f32.mxu0 0.0
        %869 = vmatmul.mubr.f32.gmra.mxu0 %v547
        %v870 = vpop.f32.mrf.mxu0
        %v871 = vadd.f32 0.0, %v870
        %v872 = vpop.f32.mrf.mxu0
        %873 = vmatprep.mubr.f32.mxu0 0.0
        %874 = vmatmul.mubr.f32.gmra.mxu0 %v550
        %v875 = vpop.f32.mrf.mxu0
        %v876 = vadd.f32 0.0, %v875
        %v877 = vpop.f32.mrf.mxu0
        %878 = vmatprep.mubr.f32.mxu0 0.0
        %879 = vmatmul.mubr.f32.gmra.mxu0 %v553
        %v880 = vpop.f32.mrf.mxu0
        %v881 = vadd.f32 0.0, %v880
        %v882 = vpop.f32.mrf.mxu0
        %883 = vmatprep.mubr.f32.mxu0 0.0
        %884 = vmatmul.mubr.f32.gmra.mxu0 %v556
        %v885 = vpop.f32.mrf.mxu0
        %v886 = vadd.f32 0.0, %v885
        %v887 = vpop.f32.mrf.mxu0
        %888 = vmatprep.mubr.f32.mxu0 0.0
        %889 = vmatmul.mubr.f32.gmra.mxu0 %v559
        %v890 = vpop.f32.mrf.mxu0
        %v891 = vadd.f32 0.0, %v890
        %v892 = vpop.f32.mrf.mxu0
        %893 = vmatprep.mubr.f32.mxu0 0.0
        %894 = vmatmul.mubr.f32.gmra.mxu0 %v562
        %v895 = vpop.f32.mrf.mxu0
        %v896 = vadd.f32 0.0, %v895
        %v897 = vpop.f32.mrf.mxu0
        %898 = vmatprep.mubr.f32.mxu0 0.0
        %899 = vmatmul.mubr.f32.gmra.mxu0 %v565
        %v900 = vpop.f32.mrf.mxu0
        %v901 = vadd.f32 0.0, %v900
        %v902 = vpop.f32.mrf.mxu0
        %903 = vmatprep.mubr.f32.mxu0 0.0
        %904 = vmatmul.mubr.f32.gmra.mxu0 %v568
        %v905 = vpop.f32.mrf.mxu0
        %v906 = vadd.f32 0.0, %v905
        %v907 = vpop.f32.mrf.mxu0
        %908 = vmatprep.mubr.f32.mxu0 0.0
        %909 = vmatmul.mubr.f32.gmra.mxu0 %v571
        %v910 = vpop.f32.mrf.mxu0
        %v911 = vadd.f32 0.0, %v910
        %v912 = vpop.f32.mrf.mxu0
        %913 = vmatprep.mubr.f32.mxu0 0.0
        %914 = vmatmul.mubr.f32.gmra.mxu0 %v574
        %v915 = vpop.f32.mrf.mxu0
        %v916 = vadd.f32 0.0, %v915
        %v917 = vpop.f32.mrf.mxu0
        %918 = vmatprep.mubr.f32.mxu0 0.0
        %919 = vmatmul.mubr.f32.gmra.mxu0 %v577
        %v920 = vpop.f32.mrf.mxu0
        %v921 = vadd.f32 0.0, %v920
        %v922 = vpop.f32.mrf.mxu0
        %923 = vmatprep.mubr.f32.mxu0 0.0
        %924 = vmatmul.mubr.f32.gmra.mxu0 %v580
        %v925 = vpop.f32.mrf.mxu0
        %v926 = vadd.f32 0.0, %v925
        %v927 = vpop.f32.mrf.mxu0
        %928 = vmatprep.mubr.f32.mxu0 0.0
        %929 = vmatmul.mubr.f32.gmra.mxu0 %v583
        %v930 = vpop.f32.mrf.mxu0
        %v931 = vadd.f32 0.0, %v930
        %v932 = vpop.f32.mrf.mxu0
        %933 = vmatprep.mubr.f32.mxu0 0.0
        %934 = vmatmul.mubr.f32.gmra.mxu0 %v586
        %v935 = vpop.f32.mrf.mxu0
        %v936 = vadd.f32 0.0, %v935
        %v937 = vpop.f32.mrf.mxu0
        %938 = vmatprep.mubr.f32.mxu0 0.0
        %939 = vmatmul.mubr.f32.gmra.mxu0 %v589
        %v940 = vpop.f32.mrf.mxu0
        %v941 = vadd.f32 0.0, %v940
        %v942 = vpop.f32.mrf.mxu0
        %943 = vmatprep.mubr.f32.mxu0 0.0
        %944 = vmatmul.mubr.f32.gmra.mxu0 %v592
        %v945 = vpop.f32.mrf.mxu0
        %v946 = vadd.f32 0.0, %v945
        %v947 = vpop.f32.mrf.mxu0
        %948 = vmatprep.mubr.f32.mxu0 0.0
        %949 = vmatmul.mubr.f32.gmra.mxu0 %v595
        %v950 = vpop.f32.mrf.mxu0
        %v951 = vadd.f32 0.0, %v950
        %v952 = vpop.f32.mrf.mxu0
        %953 = vmatprep.mubr.f32.mxu0 0.0
        %954 = vmatmul.mubr.f32.gmra.mxu0 %v598
        %v955 = vpop.f32.mrf.mxu0
        %v956 = vadd.f32 0.0, %v955
        %v957 = vpop.f32.mrf.mxu0
        %958 = vmatprep.mubr.f32.mxu0 0.0
        %959 = vmatmul.mubr.f32.gmra.mxu0 %v601
        %v960 = vpop.f32.mrf.mxu0
        %v961 = vadd.f32 0.0, %v960
        %v962 = vpop.f32.mrf.mxu0
        %963 = vmatprep.mubr.f32.mxu0 0.0
        %964 = vmatmul.mubr.f32.gmra.mxu0 %v604
        %v965 = vpop.f32.mrf.mxu0
        %v966 = vadd.f32 0.0, %v965
        %v967 = vpop.f32.mrf.mxu0
        %968 = vmatprep.mubr.f32.mxu0 0.0
        %969 = vmatmul.mubr.f32.gmra.mxu0 %v607
        %v970 = vpop.f32.mrf.mxu0
        %v971 = vadd.f32 0.0, %v970
        %v972 = vpop.f32.mrf.mxu0
        %973 = vmatprep.mubr.f32.mxu0 0.0
        %974 = vmatmul.mubr.f32.gmra.mxu0 %v610
        %v975 = vpop.f32.mrf.mxu0
        %v976 = vadd.f32 0.0, %v975
        %v977 = vpop.f32.mrf.mxu0
        %978 = vmatprep.mubr.f32.mxu0 0.0
        %979 = vmatmul.mubr.f32.gmra.mxu0 %v613
        %v980 = vpop.f32.mrf.mxu0
        %v981 = vadd.f32 0.0, %v980
        %v982 = vpop.f32.mrf.mxu0
        %983 = vmatprep.mubr.f32.mxu0 0.0
        %984 = vmatmul.mubr.f32.gmra.mxu0 %v616
        %v985 = vpop.f32.mrf.mxu0
        %v986 = vadd.f32 0.0, %v985
        %v987 = vpop.f32.mrf.mxu0
        %988 = vmatprep.mubr.f32.mxu0 0.0
        %989 = vmatmul.mubr.f32.gmra.mxu0 %v619
        %v990 = vpop.f32.mrf.mxu0
        %v991 = vadd.f32 0.0, %v990
        %v992 = vpop.f32.mrf.mxu0
        %993 = vmatprep.mubr.f32.mxu0 0.0
        %994 = vmatmul.mubr.f32.gmra.mxu0 %v622
        %v995 = vpop.f32.mrf.mxu0
        %v996 = vadd.f32 0.0, %v995
        %v997 = vpop.f32.mrf.mxu0
        %998 = vmatprep.mubr.f32.mxu0 0.0
        %999 = vmatmul.mubr.f32.gmra.mxu0 %v625
        %v1000 = vpop.f32.mrf.mxu0
        %v1001 = vadd.f32 0.0, %v1000
        %v1002 = vpop.f32.mrf.mxu0
        %1003 = vmatprep.mubr.f32.mxu0 0.0
        %1004 = vmatmul.mubr.f32.gmra.mxu0 %v628
        %v1005 = vpop.f32.mrf.mxu0
        %v1006 = vadd.f32 0.0, %v1005
        %v1007 = vpop.f32.mrf.mxu0
        %1008 = vmatprep.mubr.f32.mxu0 0.0
        %1009 = vmatmul.mubr.f32.gmra.mxu0 %v631
        %v1010 = vpop.f32.mrf.mxu0
        %v1011 = vadd.f32 0.0, %v1010
        %v1012 = vpop.f32.mrf.mxu0
        %1013 = vmatprep.mubr.f32.mxu0 0.0
        %1014 = vmatmul.mubr.f32.gmra.mxu0 %v634
        %v1015 = vpop.f32.mrf.mxu0
        %v1016 = vadd.f32 0.0, %v1015
        %v1017 = vpop.f32.mrf.mxu0
        %1018 = vmatprep.mubr.f32.mxu0 0.0
        %1019 = vmatmul.mubr.f32.gmra.mxu0 %v637
        %v1020 = vpop.f32.mrf.mxu0
        %v1021 = vadd.f32 0.0, %v1020
        %v1022 = vpop.f32.mrf.mxu0
        %1023 = vdwg.mxu0
        %v1024 = vpack.c.bf16 %v711, %v706
        %v1025 = vpack.c.bf16 %v721, %v716
        %v1026 = vpack.c.bf16 %v731, %v726
        %v1027 = vpack.c.bf16 %v741, %v736
        %v1028 = vpack.c.bf16 %v751, %v746
        %v1029 = vpack.c.bf16 %v761, %v756
        %v1030 = vpack.c.bf16 %v771, %v766
        %v1031 = vpack.c.bf16 %v781, %v776
        %v1032 = vpack.c.bf16 %v791, %v786
        %v1033 = vpack.c.bf16 %v801, %v796
        %v1034 = vpack.c.bf16 %v811, %v806
        %v1035 = vpack.c.bf16 %v821, %v816
        %v1036 = vpack.c.bf16 %v831, %v826
        %v1037 = vpack.c.bf16 %v841, %v836
        %v1038 = vpack.c.bf16 %v851, %v846
        %v1039 = vpack.c.bf16 %v861, %v856
        %v1040 = vpack.c.bf16 %v871, %v866
        %v1041 = vpack.c.bf16 %v881, %v876
        %v1042 = vpack.c.bf16 %v891, %v886
        %v1043 = vpack.c.bf16 %v901, %v896
        %v1044 = vpack.c.bf16 %v911, %v906
        %v1045 = vpack.c.bf16 %v921, %v916
        %v1046 = vpack.c.bf16 %v931, %v926
        %v1047 = vpack.c.bf16 %v941, %v936
        %v1048 = vpack.c.bf16 %v951, %v946
        %v1049 = vpack.c.bf16 %v961, %v956
        %v1050 = vpack.c.bf16 %v971, %v966
        %v1051 = vpack.c.bf16 %v981, %v976
        %v1052 = vpack.c.bf16 %v991, %v986
        %v1053 = vpack.c.bf16 %v1001, %v996
        %v1054 = vpack.c.bf16 %v1011, %v1006
        %v1055 = vpack.c.bf16 %v1021, %v1016
        %v1088 = vunpack.c.l.b16 %v1024
        %v1089 = vunpack.c.h.b16 %v1024
        %v1090 = vunpack.c.l.b16 %v1025
        %v1091 = vunpack.c.h.b16 %v1025
        %v1092 = vunpack.c.l.b16 %v1026
        %v1093 = vunpack.c.h.b16 %v1026
        %v1094 = vunpack.c.l.b16 %v1027
        %v1095 = vunpack.c.h.b16 %v1027
        %v1096 = vunpack.c.l.b16 %v1028
        %v1097 = vunpack.c.h.b16 %v1028
        %v1098 = vunpack.c.l.b16 %v1029
        %v1099 = vunpack.c.h.b16 %v1029
        %v1100 = vunpack.c.l.b16 %v1030
        %v1101 = vunpack.c.h.b16 %v1030
        %v1102 = vunpack.c.l.b16 %v1031
        %v1103 = vunpack.c.h.b16 %v1031
        %v1104 = vunpack.c.l.b16 %v1032
        %v1105 = vunpack.c.h.b16 %v1032
        %v1106 = vunpack.c.l.b16 %v1033
        %v1107 = vunpack.c.h.b16 %v1033
        %v1108 = vunpack.c.l.b16 %v1034
        %v1109 = vunpack.c.h.b16 %v1034
        %v1110 = vunpack.c.l.b16 %v1035
        %v1111 = vunpack.c.h.b16 %v1035
        %v1112 = vunpack.c.l.b16 %v1036
        %v1113 = vunpack.c.h.b16 %v1036
        %v1114 = vunpack.c.l.b16 %v1037
        %v1115 = vunpack.c.h.b16 %v1037
        %v1116 = vunpack.c.l.b16 %v1038
        %v1117 = vunpack.c.h.b16 %v1038
        %v1118 = vunpack.c.l.b16 %v1039
        %v1119 = vunpack.c.h.b16 %v1039
        %v1120 = vunpack.c.l.b16 %v1040
        %v1121 = vunpack.c.h.b16 %v1040
        %v1122 = vunpack.c.l.b16 %v1041
        %v1123 = vunpack.c.h.b16 %v1041
        %v1124 = vunpack.c.l.b16 %v1042
        %v1125 = vunpack.c.h.b16 %v1042
        %v1126 = vunpack.c.l.b16 %v1043
        %v1127 = vunpack.c.h.b16 %v1043
        %v1128 = vunpack.c.l.b16 %v1044
        %v1129 = vunpack.c.h.b16 %v1044
        %v1130 = vunpack.c.l.b16 %v1045
        %v1131 = vunpack.c.h.b16 %v1045
        %v1132 = vunpack.c.l.b16 %v1046
        %v1133 = vunpack.c.h.b16 %v1046
        %v1134 = vunpack.c.l.b16 %v1047
        %v1135 = vunpack.c.h.b16 %v1047
        %v1136 = vunpack.c.l.b16 %v1048
        %v1137 = vunpack.c.h.b16 %v1048
        %v1138 = vunpack.c.l.b16 %v1049
        %v1139 = vunpack.c.h.b16 %v1049
        %v1140 = vunpack.c.l.b16 %v1050
        %v1141 = vunpack.c.h.b16 %v1050
        %v1142 = vunpack.c.l.b16 %v1051
        %v1143 = vunpack.c.h.b16 %v1051
        %v1144 = vunpack.c.l.b16 %v1052
        %v1145 = vunpack.c.h.b16 %v1052
        %v1146 = vunpack.c.l.b16 %v1053
        %v1147 = vunpack.c.h.b16 %v1053
        %v1148 = vunpack.c.l.b16 %v1054
        %v1149 = vunpack.c.h.b16 %v1054
        %v1150 = vunpack.c.l.b16 %v1055
        %v1151 = vunpack.c.h.b16 %v1055
        %v1152 = vpack.c.b16 %v1088, %v1088
        %v1153 = vpack.c.b16 %v1089, %v1089
        %v1154 = vpack.c.b16 %v1090, %v1090
        %v1155 = vpack.c.b16 %v1091, %v1091
        %v1156 = vpack.c.b16 %v1092, %v1092
        %v1157 = vpack.c.b16 %v1093, %v1093
        %v1158 = vpack.c.b16 %v1094, %v1094
        %v1159 = vpack.c.b16 %v1095, %v1095
        %v1160 = vpack.c.b16 %v1096, %v1096
        %v1161 = vpack.c.b16 %v1097, %v1097
        %v1162 = vpack.c.b16 %v1098, %v1098
        %v1163 = vpack.c.b16 %v1099, %v1099
        %v1164 = vpack.c.b16 %v1100, %v1100
        %v1165 = vpack.c.b16 %v1101, %v1101
        %v1166 = vpack.c.b16 %v1102, %v1102
        %v1167 = vpack.c.b16 %v1103, %v1103
        %v1168 = vpack.c.b16 %v1104, %v1104
        %v1169 = vpack.c.b16 %v1105, %v1105
        %v1170 = vpack.c.b16 %v1106, %v1106
        %v1171 = vpack.c.b16 %v1107, %v1107
        %v1172 = vpack.c.b16 %v1108, %v1108
        %v1173 = vpack.c.b16 %v1109, %v1109
        %v1174 = vpack.c.b16 %v1110, %v1110
        %v1175 = vpack.c.b16 %v1111, %v1111
        %v1176 = vpack.c.b16 %v1112, %v1112
        %v1177 = vpack.c.b16 %v1113, %v1113
        %v1178 = vpack.c.b16 %v1114, %v1114
        %v1179 = vpack.c.b16 %v1115, %v1115
        %v1180 = vpack.c.b16 %v1116, %v1116
        %v1181 = vpack.c.b16 %v1117, %v1117
        %v1182 = vpack.c.b16 %v1118, %v1118
        %v1183 = vpack.c.b16 %v1119, %v1119
        %v1184 = vpack.c.b16 %v1120, %v1120
        %v1185 = vpack.c.b16 %v1121, %v1121
        %v1186 = vpack.c.b16 %v1122, %v1122
        %v1187 = vpack.c.b16 %v1123, %v1123
        %v1188 = vpack.c.b16 %v1124, %v1124
        %v1189 = vpack.c.b16 %v1125, %v1125
        %v1190 = vpack.c.b16 %v1126, %v1126
        %v1191 = vpack.c.b16 %v1127, %v1127
        %v1192 = vpack.c.b16 %v1128, %v1128
        %v1193 = vpack.c.b16 %v1129, %v1129
        %v1194 = vpack.c.b16 %v1130, %v1130
        %v1195 = vpack.c.b16 %v1131, %v1131
        %v1196 = vpack.c.b16 %v1132, %v1132
        %v1197 = vpack.c.b16 %v1133, %v1133
        %v1198 = vpack.c.b16 %v1134, %v1134
        %v1199 = vpack.c.b16 %v1135, %v1135
        %v1200 = vpack.c.b16 %v1136, %v1136
        %v1201 = vpack.c.b16 %v1137, %v1137
        %v1202 = vpack.c.b16 %v1138, %v1138
        %v1203 = vpack.c.b16 %v1139, %v1139
        %v1204 = vpack.c.b16 %v1140, %v1140
        %v1205 = vpack.c.b16 %v1141, %v1141
        %v1206 = vpack.c.b16 %v1142, %v1142
        %v1207 = vpack.c.b16 %v1143, %v1143
        %v1208 = vpack.c.b16 %v1144, %v1144
        %v1209 = vpack.c.b16 %v1145, %v1145
        %v1210 = vpack.c.b16 %v1146, %v1146
        %v1211 = vpack.c.b16 %v1147, %v1147
        %v1212 = vpack.c.b16 %v1148, %v1148
        %v1213 = vpack.c.b16 %v1149, %v1149
        %v1214 = vpack.c.b16 %v1150, %v1150
        %v1215 = vpack.c.b16 %v1151, %v1151
        %1280 = vst [vmem:[%s309] sm:$0xf] %v1152
        %1281 = vst [vmem:[%s309 + $0x4] sm:$0xf] %v1153
        %1282 = vst [vmem:[%s309 + $0x8] sm:$0xf] %v1154
        %1283 = vst [vmem:[%s309 + $0xc] sm:$0xf] %v1155
        %1284 = vst [vmem:[%s309 + $0x10] sm:$0xf] %v1156
        %1285 = vst [vmem:[%s309 + $0x14] sm:$0xf] %v1157
        %1286 = vst [vmem:[%s309 + $0x18] sm:$0xf] %v1158
        %1287 = vst [vmem:[%s309 + $0x1c] sm:$0xf] %v1159
        %1288 = vst [vmem:[%s309 + $0x20] sm:$0xf] %v1160
        %1289 = vst [vmem:[%s309 + $0x24] sm:$0xf] %v1161
        %1290 = vst [vmem:[%s309 + $0x28] sm:$0xf] %v1162
        %1291 = vst [vmem:[%s309 + $0x2c] sm:$0xf] %v1163
        %1292 = vst [vmem:[%s309 + $0x30] sm:$0xf] %v1164
        %1293 = vst [vmem:[%s309 + $0x34] sm:$0xf] %v1165
        %1294 = vst [vmem:[%s309 + $0x38] sm:$0xf] %v1166
        %1295 = vst [vmem:[%s309 + $0x3c] sm:$0xf] %v1167
        %1296 = vst [vmem:[%s309 + $0x40] sm:$0xf] %v1168
        %1297 = vst [vmem:[%s309 + $0x44] sm:$0xf] %v1169
        %1298 = vst [vmem:[%s309 + $0x48] sm:$0xf] %v1170
        %1299 = vst [vmem:[%s309 + $0x4c] sm:$0xf] %v1171
        %1300 = vst [vmem:[%s309 + $0x50] sm:$0xf] %v1172
        %1301 = vst [vmem:[%s309 + $0x54] sm:$0xf] %v1173
        %1302 = vst [vmem:[%s309 + $0x58] sm:$0xf] %v1174
        %1303 = vst [vmem:[%s309 + $0x5c] sm:$0xf] %v1175
        %1304 = vst [vmem:[%s309 + $0x60] sm:$0xf] %v1176
        %1305 = vst [vmem:[%s309 + $0x64] sm:$0xf] %v1177
        %1306 = vst [vmem:[%s309 + $0x68] sm:$0xf] %v1178
        %1307 = vst [vmem:[%s309 + $0x6c] sm:$0xf] %v1179
        %1308 = vst [vmem:[%s309 + $0x70] sm:$0xf] %v1180
        %1309 = vst [vmem:[%s309 + $0x74] sm:$0xf] %v1181
        %1310 = vst [vmem:[%s309 + $0x78] sm:$0xf] %v1182
        %1311 = vst [vmem:[%s309 + $0x7c] sm:$0xf] %v1183
        %1312 = vst [vmem:[%s309 + $0x80] sm:$0xf] %v1184
        %1313 = vst [vmem:[%s309 + $0x84] sm:$0xf] %v1185
        %1314 = vst [vmem:[%s309 + $0x88] sm:$0xf] %v1186
        %1315 = vst [vmem:[%s309 + $0x8c] sm:$0xf] %v1187
        %1316 = vst [vmem:[%s309 + $0x90] sm:$0xf] %v1188
        %1317 = vst [vmem:[%s309 + $0x94] sm:$0xf] %v1189
        %1318 = vst [vmem:[%s309 + $0x98] sm:$0xf] %v1190
        %1319 = vst [vmem:[%s309 + $0x9c] sm:$0xf] %v1191
        %1320 = vst [vmem:[%s309 + $0xa0] sm:$0xf] %v1192
        %1321 = vst [vmem:[%s309 + $0xa4] sm:$0xf] %v1193
        %1322 = vst [vmem:[%s309 + $0xa8] sm:$0xf] %v1194
        %1323 = vst [vmem:[%s309 + $0xac] sm:$0xf] %v1195
        %1324 = vst [vmem:[%s309 + $0xb0] sm:$0xf] %v1196
        %1325 = vst [vmem:[%s309 + $0xb4] sm:$0xf] %v1197
        %1326 = vst [vmem:[%s309 + $0xb8] sm:$0xf] %v1198
        %1327 = vst [vmem:[%s309 + $0xbc] sm:$0xf] %v1199
        %1328 = vst [vmem:[%s309 + $0xc0] sm:$0xf] %v1200
        %1329 = vst [vmem:[%s309 + $0xc4] sm:$0xf] %v1201
        %1330 = vst [vmem:[%s309 + $0xc8] sm:$0xf] %v1202
        %1331 = vst [vmem:[%s309 + $0xcc] sm:$0xf] %v1203
        %1332 = vst [vmem:[%s309 + $0xd0] sm:$0xf] %v1204
        %1333 = vst [vmem:[%s309 + $0xd4] sm:$0xf] %v1205
        %1334 = vst [vmem:[%s309 + $0xd8] sm:$0xf] %v1206
        %1335 = vst [vmem:[%s309 + $0xdc] sm:$0xf] %v1207
        %1336 = vst [vmem:[%s309 + $0xe0] sm:$0xf] %v1208
        %1337 = vst [vmem:[%s309 + $0xe4] sm:$0xf] %v1209
        %1338 = vst [vmem:[%s309 + $0xe8] sm:$0xf] %v1210
        %1339 = vst [vmem:[%s309 + $0xec] sm:$0xf] %v1211
        %1340 = vst [vmem:[%s309 + $0xf0] sm:$0xf] %v1212
        %1341 = vst [vmem:[%s309 + $0xf4] sm:$0xf] %v1213
        %1342 = vst [vmem:[%s309 + $0xf8] sm:$0xf] %v1214
        %1343 = vst [vmem:[%s309 + $0xfc] sm:$0xf] %v1215
        %v1344 = vld [vmem:[%s347] sm:$0xff]
        %v1345 = vld [vmem:[%s347 + $0x8] sm:$0xff]
        %v1346 = vld [vmem:[%s347 + $0x10] sm:$0xff]
        %v1347 = vld [vmem:[%s347 + $0x18] sm:$0xff]
        %v1348 = vld [vmem:[%s347 + $0x20] sm:$0xff]
        %v1349 = vld [vmem:[%s347 + $0x28] sm:$0xff]
        %v1350 = vld [vmem:[%s347 + $0x30] sm:$0xff]
        %v1351 = vld [vmem:[%s347 + $0x38] sm:$0xff]
        %v1352 = vld [vmem:[%s347 + $0x40] sm:$0xff]
        %v1353 = vld [vmem:[%s347 + $0x48] sm:$0xff]
        %v1354 = vld [vmem:[%s347 + $0x50] sm:$0xff]
        %v1355 = vld [vmem:[%s347 + $0x58] sm:$0xff]
        %v1356 = vld [vmem:[%s347 + $0x60] sm:$0xff]
        %v1357 = vld [vmem:[%s347 + $0x68] sm:$0xff]
        %v1358 = vld [vmem:[%s347 + $0x70] sm:$0xff]
        %v1359 = vld [vmem:[%s347 + $0x78] sm:$0xff]
        %1360 = vmatprep.subr.mxu0 0.0
        %1361 = vmatpush1.msra.mxu0 %v1359
        %1362 = vmatprep.subr.mxu0 0.0
        %1363 = vmatpush1.msra.mxu0 %v1358
        %1364 = vmatprep.subr.mxu0 0.0
        %1365 = vmatpush1.msra.mxu0 %v1357
        %1366 = vmatprep.subr.mxu0 0.0
        %1367 = vmatpush1.msra.mxu0 %v1356
        %1368 = vmatprep.subr.mxu0 0.0
        %1369 = vmatpush1.msra.mxu0 %v1355
        %1370 = vmatprep.subr.mxu0 0.0
        %1371 = vmatpush1.msra.mxu0 %v1354
        %1372 = vmatprep.subr.mxu0 0.0
        %1373 = vmatpush1.msra.mxu0 %v1353
        %1374 = vmatprep.subr.mxu0 0.0
        %1375 = vmatpush1.msra.mxu0 %v1352
        %1376 = vmatprep.subr.mxu0 0.0
        %1377 = vmatpush1.msra.mxu0 %v1351
        %1378 = vmatprep.subr.mxu0 0.0
        %1379 = vmatpush1.msra.mxu0 %v1350
        %1380 = vmatprep.subr.mxu0 0.0
        %1381 = vmatpush1.msra.mxu0 %v1349
        %1382 = vmatprep.subr.mxu0 0.0
        %1383 = vmatpush1.msra.mxu0 %v1348
        %1384 = vmatprep.subr.mxu0 0.0
        %1385 = vmatpush1.msra.mxu0 %v1347
        %1386 = vmatprep.subr.mxu0 0.0
        %1387 = vmatpush1.msra.mxu0 %v1346
        %1388 = vmatprep.subr.mxu0 0.0
        %1389 = vmatpush1.msra.mxu0 %v1345
        %1390 = vmatprep.subr.mxu0 0.0
        %1391 = vmatpush1.msra.mxu0 %v1344
        %1392 = vmatprep.subr.mxu0 0.0
        %1393 = vmatpush2.msra.mxu0 0.0
        %1394 = vmatprep.subr.mxu0 0.0
        %1395 = vmatpush2.msra.mxu0 0.0
        %1396 = vmatprep.subr.mxu0 0.0
        %1397 = vmatpush2.msra.mxu0 0.0
        %1398 = vmatprep.subr.mxu0 0.0
        %1399 = vmatpush2.msra.mxu0 0.0
        %1400 = vmatprep.subr.mxu0 0.0
        %1401 = vmatpush2.msra.mxu0 0.0
        %1402 = vmatprep.subr.mxu0 0.0
        %1403 = vmatpush2.msra.mxu0 0.0
        %1404 = vmatprep.subr.mxu0 0.0
        %1405 = vmatpush2.msra.mxu0 0.0
        %1406 = vmatprep.subr.mxu0 0.0
        %1407 = vmatpush2.msra.mxu0 0.0
        %1408 = vmatprep.subr.mxu0 0.0
        %1409 = vmatpush2.msra.mxu0 0.0
        %1410 = vmatprep.subr.mxu0 0.0
        %1411 = vmatpush2.msra.mxu0 0.0
        %1412 = vmatprep.subr.mxu0 0.0
        %1413 = vmatpush2.msra.mxu0 0.0
        %1414 = vmatprep.subr.mxu0 0.0
        %1415 = vmatpush2.msra.mxu0 0.0
        %1416 = vmatprep.subr.mxu0 0.0
        %1417 = vmatpush2.msra.mxu0 0.0
        %1418 = vmatprep.subr.mxu0 0.0
        %1419 = vmatpush2.msra.mxu0 0.0
        %1420 = vmatprep.subr.mxu0 0.0
        %1421 = vmatpush2.msra.mxu0 0.0
        %1422 = vmatprep.subr.mxu0 0.0
        %1423 = vmatpush2.msra.mxu0 0.0
        %1424 = vmatprep.mubr.f32.mxu0 0.0
        %1425 = vmatmul.mubr.f32.gmra.mxu0 %v706
        %v1426 = vpop.f32.mrf.mxu0
        %v1427 = vadd.f32 0.0, %v1426
        %v1428 = vpop.f32.mrf.mxu0
        %1429 = vmatprep.mubr.f32.mxu0 0.0
        %1430 = vmatmul.mubr.f32.gmra.mxu0 %v711
        %v1431 = vpop.f32.mrf.mxu0
        %v1432 = vadd.f32 0.0, %v1431
        %v1433 = vpop.f32.mrf.mxu0
        %1434 = vmatprep.mubr.f32.mxu0 0.0
        %1435 = vmatmul.mubr.f32.gmra.mxu0 %v716
        %v1436 = vpop.f32.mrf.mxu0
        %v1437 = vadd.f32 0.0, %v1436
        %v1438 = vpop.f32.mrf.mxu0
        %1439 = vmatprep.mubr.f32.mxu0 0.0
        %1440 = vmatmul.mubr.f32.gmra.mxu0 %v721
        %v1441 = vpop.f32.mrf.mxu0
        %v1442 = vadd.f32 0.0, %v1441
        %v1443 = vpop.f32.mrf.mxu0
        %1444 = vmatprep.mubr.f32.mxu0 0.0
        %1445 = vmatmul.mubr.f32.gmra.mxu0 %v726
        %v1446 = vpop.f32.mrf.mxu0
        %v1447 = vadd.f32 0.0, %v1446
        %v1448 = vpop.f32.mrf.mxu0
        %1449 = vmatprep.mubr.f32.mxu0 0.0
        %1450 = vmatmul.mubr.f32.gmra.mxu0 %v731
        %v1451 = vpop.f32.mrf.mxu0
        %v1452 = vadd.f32 0.0, %v1451
        %v1453 = vpop.f32.mrf.mxu0
        %1454 = vmatprep.mubr.f32.mxu0 0.0
        %1455 = vmatmul.mubr.f32.gmra.mxu0 %v736
        %v1456 = vpop.f32.mrf.mxu0
        %v1457 = vadd.f32 0.0, %v1456
        %v1458 = vpop.f32.mrf.mxu0
        %1459 = vmatprep.mubr.f32.mxu0 0.0
        %1460 = vmatmul.mubr.f32.gmra.mxu0 %v741
        %v1461 = vpop.f32.mrf.mxu0
        %v1462 = vadd.f32 0.0, %v1461
        %v1463 = vpop.f32.mrf.mxu0
        %1464 = vmatprep.mubr.f32.mxu0 0.0
        %1465 = vmatmul.mubr.f32.gmra.mxu0 %v746
        %v1466 = vpop.f32.mrf.mxu0
        %v1467 = vadd.f32 0.0, %v1466
        %v1468 = vpop.f32.mrf.mxu0
        %1469 = vmatprep.mubr.f32.mxu0 0.0
        %1470 = vmatmul.mubr.f32.gmra.mxu0 %v751
        %v1471 = vpop.f32.mrf.mxu0
        %v1472 = vadd.f32 0.0, %v1471
        %v1473 = vpop.f32.mrf.mxu0
        %1474 = vmatprep.mubr.f32.mxu0 0.0
        %1475 = vmatmul.mubr.f32.gmra.mxu0 %v756
        %v1476 = vpop.f32.mrf.mxu0
        %v1477 = vadd.f32 0.0, %v1476
        %v1478 = vpop.f32.mrf.mxu0
        %1479 = vmatprep.mubr.f32.mxu0 0.0
        %1480 = vmatmul.mubr.f32.gmra.mxu0 %v761
        %v1481 = vpop.f32.mrf.mxu0
        %v1482 = vadd.f32 0.0, %v1481
        %v1483 = vpop.f32.mrf.mxu0
        %1484 = vmatprep.mubr.f32.mxu0 0.0
        %1485 = vmatmul.mubr.f32.gmra.mxu0 %v766
        %v1486 = vpop.f32.mrf.mxu0
        %v1487 = vadd.f32 0.0, %v1486
        %v1488 = vpop.f32.mrf.mxu0
        %1489 = vmatprep.mubr.f32.mxu0 0.0
        %1490 = vmatmul.mubr.f32.gmra.mxu0 %v771
        %v1491 = vpop.f32.mrf.mxu0
        %v1492 = vadd.f32 0.0, %v1491
        %v1493 = vpop.f32.mrf.mxu0
        %1494 = vmatprep.mubr.f32.mxu0 0.0
        %1495 = vmatmul.mubr.f32.gmra.mxu0 %v776
        %v1496 = vpop.f32.mrf.mxu0
        %v1497 = vadd.f32 0.0, %v1496
        %v1498 = vpop.f32.mrf.mxu0
        %1499 = vmatprep.mubr.f32.mxu0 0.0
        %1500 = vmatmul.mubr.f32.gmra.mxu0 %v781
        %v1501 = vpop.f32.mrf.mxu0
        %v1502 = vadd.f32 0.0, %v1501
        %v1503 = vpop.f32.mrf.mxu0
        %1504 = vmatprep.mubr.f32.mxu0 0.0
        %1505 = vmatmul.mubr.f32.gmra.mxu0 %v786
        %v1506 = vpop.f32.mrf.mxu0
        %v1507 = vadd.f32 0.0, %v1506
        %v1508 = vpop.f32.mrf.mxu0
        %1509 = vmatprep.mubr.f32.mxu0 0.0
        %1510 = vmatmul.mubr.f32.gmra.mxu0 %v791
        %v1511 = vpop.f32.mrf.mxu0
        %v1512 = vadd.f32 0.0, %v1511
        %v1513 = vpop.f32.mrf.mxu0
        %1514 = vmatprep.mubr.f32.mxu0 0.0
        %1515 = vmatmul.mubr.f32.gmra.mxu0 %v796
        %v1516 = vpop.f32.mrf.mxu0
        %v1517 = vadd.f32 0.0, %v1516
        %v1518 = vpop.f32.mrf.mxu0
        %1519 = vmatprep.mubr.f32.mxu0 0.0
        %1520 = vmatmul.mubr.f32.gmra.mxu0 %v801
        %v1521 = vpop.f32.mrf.mxu0
        %v1522 = vadd.f32 0.0, %v1521
        %v1523 = vpop.f32.mrf.mxu0
        %1524 = vmatprep.mubr.f32.mxu0 0.0
        %1525 = vmatmul.mubr.f32.gmra.mxu0 %v806
        %v1526 = vpop.f32.mrf.mxu0
        %v1527 = vadd.f32 0.0, %v1526
        %v1528 = vpop.f32.mrf.mxu0
        %1529 = vmatprep.mubr.f32.mxu0 0.0
        %1530 = vmatmul.mubr.f32.gmra.mxu0 %v811
        %v1531 = vpop.f32.mrf.mxu0
        %v1532 = vadd.f32 0.0, %v1531
        %v1533 = vpop.f32.mrf.mxu0
        %1534 = vmatprep.mubr.f32.mxu0 0.0
        %1535 = vmatmul.mubr.f32.gmra.mxu0 %v816
        %v1536 = vpop.f32.mrf.mxu0
        %v1537 = vadd.f32 0.0, %v1536
        %v1538 = vpop.f32.mrf.mxu0
        %1539 = vmatprep.mubr.f32.mxu0 0.0
        %1540 = vmatmul.mubr.f32.gmra.mxu0 %v821
        %v1541 = vpop.f32.mrf.mxu0
        %v1542 = vadd.f32 0.0, %v1541
        %v1543 = vpop.f32.mrf.mxu0
        %1544 = vmatprep.mubr.f32.mxu0 0.0
        %1545 = vmatmul.mubr.f32.gmra.mxu0 %v826
        %v1546 = vpop.f32.mrf.mxu0
        %v1547 = vadd.f32 0.0, %v1546
        %v1548 = vpop.f32.mrf.mxu0
        %1549 = vmatprep.mubr.f32.mxu0 0.0
        %1550 = vmatmul.mubr.f32.gmra.mxu0 %v831
        %v1551 = vpop.f32.mrf.mxu0
        %v1552 = vadd.f32 0.0, %v1551
        %v1553 = vpop.f32.mrf.mxu0
        %1554 = vmatprep.mubr.f32.mxu0 0.0
        %1555 = vmatmul.mubr.f32.gmra.mxu0 %v836
        %v1556 = vpop.f32.mrf.mxu0
        %v1557 = vadd.f32 0.0, %v1556
        %v1558 = vpop.f32.mrf.mxu0
        %1559 = vmatprep.mubr.f32.mxu0 0.0
        %1560 = vmatmul.mubr.f32.gmra.mxu0 %v841
        %v1561 = vpop.f32.mrf.mxu0
        %v1562 = vadd.f32 0.0, %v1561
        %v1563 = vpop.f32.mrf.mxu0
        %1564 = vmatprep.mubr.f32.mxu0 0.0
        %1565 = vmatmul.mubr.f32.gmra.mxu0 %v846
        %v1566 = vpop.f32.mrf.mxu0
        %v1567 = vadd.f32 0.0, %v1566
        %v1568 = vpop.f32.mrf.mxu0
        %1569 = vmatprep.mubr.f32.mxu0 0.0
        %1570 = vmatmul.mubr.f32.gmra.mxu0 %v851
        %v1571 = vpop.f32.mrf.mxu0
        %v1572 = vadd.f32 0.0, %v1571
        %v1573 = vpop.f32.mrf.mxu0
        %1574 = vmatprep.mubr.f32.mxu0 0.0
        %1575 = vmatmul.mubr.f32.gmra.mxu0 %v856
        %v1576 = vpop.f32.mrf.mxu0
        %v1577 = vadd.f32 0.0, %v1576
        %v1578 = vpop.f32.mrf.mxu0
        %1579 = vmatprep.mubr.f32.mxu0 0.0
        %1580 = vmatmul.mubr.f32.gmra.mxu0 %v861
        %v1581 = vpop.f32.mrf.mxu0
        %v1582 = vadd.f32 0.0, %v1581
        %v1583 = vpop.f32.mrf.mxu0
        %1584 = vmatprep.mubr.f32.mxu0 0.0
        %1585 = vmatmul.mubr.f32.gmra.mxu0 %v866
        %v1586 = vpop.f32.mrf.mxu0
        %v1587 = vadd.f32 0.0, %v1586
        %v1588 = vpop.f32.mrf.mxu0
        %1589 = vmatprep.mubr.f32.mxu0 0.0
        %1590 = vmatmul.mubr.f32.gmra.mxu0 %v871
        %v1591 = vpop.f32.mrf.mxu0
        %v1592 = vadd.f32 0.0, %v1591
        %v1593 = vpop.f32.mrf.mxu0
        %1594 = vmatprep.mubr.f32.mxu0 0.0
        %1595 = vmatmul.mubr.f32.gmra.mxu0 %v876
        %v1596 = vpop.f32.mrf.mxu0
        %v1597 = vadd.f32 0.0, %v1596
        %v1598 = vpop.f32.mrf.mxu0
        %1599 = vmatprep.mubr.f32.mxu0 0.0
        %1600 = vmatmul.mubr.f32.gmra.mxu0 %v881
        %v1601 = vpop.f32.mrf.mxu0
        %v1602 = vadd.f32 0.0, %v1601
        %v1603 = vpop.f32.mrf.mxu0
        %1604 = vmatprep.mubr.f32.mxu0 0.0
        %1605 = vmatmul.mubr.f32.gmra.mxu0 %v886
        %v1606 = vpop.f32.mrf.mxu0
        %v1607 = vadd.f32 0.0, %v1606
        %v1608 = vpop.f32.mrf.mxu0
        %1609 = vmatprep.mubr.f32.mxu0 0.0
        %1610 = vmatmul.mubr.f32.gmra.mxu0 %v891
        %v1611 = vpop.f32.mrf.mxu0
        %v1612 = vadd.f32 0.0, %v1611
        %v1613 = vpop.f32.mrf.mxu0
        %1614 = vmatprep.mubr.f32.mxu0 0.0
        %1615 = vmatmul.mubr.f32.gmra.mxu0 %v896
        %v1616 = vpop.f32.mrf.mxu0
        %v1617 = vadd.f32 0.0, %v1616
        %v1618 = vpop.f32.mrf.mxu0
        %1619 = vmatprep.mubr.f32.mxu0 0.0
        %1620 = vmatmul.mubr.f32.gmra.mxu0 %v901
        %v1621 = vpop.f32.mrf.mxu0
        %v1622 = vadd.f32 0.0, %v1621
        %v1623 = vpop.f32.mrf.mxu0
        %1624 = vmatprep.mubr.f32.mxu0 0.0
        %1625 = vmatmul.mubr.f32.gmra.mxu0 %v906
        %v1626 = vpop.f32.mrf.mxu0
        %v1627 = vadd.f32 0.0, %v1626
        %v1628 = vpop.f32.mrf.mxu0
        %1629 = vmatprep.mubr.f32.mxu0 0.0
        %1630 = vmatmul.mubr.f32.gmra.mxu0 %v911
        %v1631 = vpop.f32.mrf.mxu0
        %v1632 = vadd.f32 0.0, %v1631
        %v1633 = vpop.f32.mrf.mxu0
        %1634 = vmatprep.mubr.f32.mxu0 0.0
        %1635 = vmatmul.mubr.f32.gmra.mxu0 %v916
        %v1636 = vpop.f32.mrf.mxu0
        %v1637 = vadd.f32 0.0, %v1636
        %v1638 = vpop.f32.mrf.mxu0
        %1639 = vmatprep.mubr.f32.mxu0 0.0
        %1640 = vmatmul.mubr.f32.gmra.mxu0 %v921
        %v1641 = vpop.f32.mrf.mxu0
        %v1642 = vadd.f32 0.0, %v1641
        %v1643 = vpop.f32.mrf.mxu0
        %1644 = vmatprep.mubr.f32.mxu0 0.0
        %1645 = vmatmul.mubr.f32.gmra.mxu0 %v926
        %v1646 = vpop.f32.mrf.mxu0
        %v1647 = vadd.f32 0.0, %v1646
        %v1648 = vpop.f32.mrf.mxu0
        %1649 = vmatprep.mubr.f32.mxu0 0.0
        %1650 = vmatmul.mubr.f32.gmra.mxu0 %v931
        %v1651 = vpop.f32.mrf.mxu0
        %v1652 = vadd.f32 0.0, %v1651
        %v1653 = vpop.f32.mrf.mxu0
        %1654 = vmatprep.mubr.f32.mxu0 0.0
        %1655 = vmatmul.mubr.f32.gmra.mxu0 %v936
        %v1656 = vpop.f32.mrf.mxu0
        %v1657 = vadd.f32 0.0, %v1656
        %v1658 = vpop.f32.mrf.mxu0
        %1659 = vmatprep.mubr.f32.mxu0 0.0
        %1660 = vmatmul.mubr.f32.gmra.mxu0 %v941
        %v1661 = vpop.f32.mrf.mxu0
        %v1662 = vadd.f32 0.0, %v1661
        %v1663 = vpop.f32.mrf.mxu0
        %1664 = vmatprep.mubr.f32.mxu0 0.0
        %1665 = vmatmul.mubr.f32.gmra.mxu0 %v946
        %v1666 = vpop.f32.mrf.mxu0
        %v1667 = vadd.f32 0.0, %v1666
        %v1668 = vpop.f32.mrf.mxu0
        %1669 = vmatprep.mubr.f32.mxu0 0.0
        %1670 = vmatmul.mubr.f32.gmra.mxu0 %v951
        %v1671 = vpop.f32.mrf.mxu0
        %v1672 = vadd.f32 0.0, %v1671
        %v1673 = vpop.f32.mrf.mxu0
        %1674 = vmatprep.mubr.f32.mxu0 0.0
        %1675 = vmatmul.mubr.f32.gmra.mxu0 %v956
        %v1676 = vpop.f32.mrf.mxu0
        %v1677 = vadd.f32 0.0, %v1676
        %v1678 = vpop.f32.mrf.mxu0
        %1679 = vmatprep.mubr.f32.mxu0 0.0
        %1680 = vmatmul.mubr.f32.gmra.mxu0 %v961
        %v1681 = vpop.f32.mrf.mxu0
        %v1682 = vadd.f32 0.0, %v1681
        %v1683 = vpop.f32.mrf.mxu0
        %1684 = vmatprep.mubr.f32.mxu0 0.0
        %1685 = vmatmul.mubr.f32.gmra.mxu0 %v966
        %v1686 = vpop.f32.mrf.mxu0
        %v1687 = vadd.f32 0.0, %v1686
        %v1688 = vpop.f32.mrf.mxu0
        %1689 = vmatprep.mubr.f32.mxu0 0.0
        %1690 = vmatmul.mubr.f32.gmra.mxu0 %v971
        %v1691 = vpop.f32.mrf.mxu0
        %v1692 = vadd.f32 0.0, %v1691
        %v1693 = vpop.f32.mrf.mxu0
        %1694 = vmatprep.mubr.f32.mxu0 0.0
        %1695 = vmatmul.mubr.f32.gmra.mxu0 %v976
        %v1696 = vpop.f32.mrf.mxu0
        %v1697 = vadd.f32 0.0, %v1696
        %v1698 = vpop.f32.mrf.mxu0
        %1699 = vmatprep.mubr.f32.mxu0 0.0
        %1700 = vmatmul.mubr.f32.gmra.mxu0 %v981
        %v1701 = vpop.f32.mrf.mxu0
        %v1702 = vadd.f32 0.0, %v1701
        %v1703 = vpop.f32.mrf.mxu0
        %1704 = vmatprep.mubr.f32.mxu0 0.0
        %1705 = vmatmul.mubr.f32.gmra.mxu0 %v986
        %v1706 = vpop.f32.mrf.mxu0
        %v1707 = vadd.f32 0.0, %v1706
        %v1708 = vpop.f32.mrf.mxu0
        %1709 = vmatprep.mubr.f32.mxu0 0.0
        %1710 = vmatmul.mubr.f32.gmra.mxu0 %v991
        %v1711 = vpop.f32.mrf.mxu0
        %v1712 = vadd.f32 0.0, %v1711
        %v1713 = vpop.f32.mrf.mxu0
        %1714 = vmatprep.mubr.f32.mxu0 0.0
        %1715 = vmatmul.mubr.f32.gmra.mxu0 %v996
        %v1716 = vpop.f32.mrf.mxu0
        %v1717 = vadd.f32 0.0, %v1716
        %v1718 = vpop.f32.mrf.mxu0
        %1719 = vmatprep.mubr.f32.mxu0 0.0
        %1720 = vmatmul.mubr.f32.gmra.mxu0 %v1001
        %v1721 = vpop.f32.mrf.mxu0
        %v1722 = vadd.f32 0.0, %v1721
        %v1723 = vpop.f32.mrf.mxu0
        %1724 = vmatprep.mubr.f32.mxu0 0.0
        %1725 = vmatmul.mubr.f32.gmra.mxu0 %v1006
        %v1726 = vpop.f32.mrf.mxu0
        %v1727 = vadd.f32 0.0, %v1726
        %v1728 = vpop.f32.mrf.mxu0
        %1729 = vmatprep.mubr.f32.mxu0 0.0
        %1730 = vmatmul.mubr.f32.gmra.mxu0 %v1011
        %v1731 = vpop.f32.mrf.mxu0
        %v1732 = vadd.f32 0.0, %v1731
        %v1733 = vpop.f32.mrf.mxu0
        %1734 = vmatprep.mubr.f32.mxu0 0.0
        %1735 = vmatmul.mubr.f32.gmra.mxu0 %v1016
        %v1736 = vpop.f32.mrf.mxu0
        %v1737 = vadd.f32 0.0, %v1736
        %v1738 = vpop.f32.mrf.mxu0
        %1739 = vmatprep.mubr.f32.mxu0 0.0
        %1740 = vmatmul.mubr.f32.gmra.mxu0 %v1021
        %v1741 = vpop.f32.mrf.mxu0
        %v1742 = vadd.f32 0.0, %v1741
        %v1743 = vpop.f32.mrf.mxu0
        %1744 = vdwg.mxu0
        %vm1745 = vcmask 31744
        %1746 = vst.msk [vmem:[%s362] sm:$0xff] %vm1745, %v1427
        %1747 = vst.msk [vmem:[%s362 + $0x8] sm:$0xff] %vm1745, %v1432
        %1748 = vst.msk [vmem:[%s362 + $0x10] sm:$0xff] %vm1745, %v1437
        %1749 = vst.msk [vmem:[%s362 + $0x18] sm:$0xff] %vm1745, %v1442
        %1750 = vst.msk [vmem:[%s362 + $0x20] sm:$0xff] %vm1745, %v1447
        %1751 = vst.msk [vmem:[%s362 + $0x28] sm:$0xff] %vm1745, %v1452
        %1752 = vst.msk [vmem:[%s362 + $0x30] sm:$0xff] %vm1745, %v1457
        %1753 = vst.msk [vmem:[%s362 + $0x38] sm:$0xff] %vm1745, %v1462
        %1754 = vst.msk [vmem:[%s362 + $0x40] sm:$0xff] %vm1745, %v1467
        %1755 = vst.msk [vmem:[%s362 + $0x48] sm:$0xff] %vm1745, %v1472
        %1756 = vst.msk [vmem:[%s362 + $0x50] sm:$0xff] %vm1745, %v1477
        %1757 = vst.msk [vmem:[%s362 + $0x58] sm:$0xff] %vm1745, %v1482
        %1758 = vst.msk [vmem:[%s362 + $0x60] sm:$0xff] %vm1745, %v1487
        %1759 = vst.msk [vmem:[%s362 + $0x68] sm:$0xff] %vm1745, %v1492
        %1760 = vst.msk [vmem:[%s362 + $0x70] sm:$0xff] %vm1745, %v1497
        %1761 = vst.msk [vmem:[%s362 + $0x78] sm:$0xff] %vm1745, %v1502
        %1762 = vst.msk [vmem:[%s362 + $0x80] sm:$0xff] %vm1745, %v1507
        %1763 = vst.msk [vmem:[%s362 + $0x88] sm:$0xff] %vm1745, %v1512
        %1764 = vst.msk [vmem:[%s362 + $0x90] sm:$0xff] %vm1745, %v1517
        %1765 = vst.msk [vmem:[%s362 + $0x98] sm:$0xff] %vm1745, %v1522
        %1766 = vst.msk [vmem:[%s362 + $0xa0] sm:$0xff] %vm1745, %v1527
        %1767 = vst.msk [vmem:[%s362 + $0xa8] sm:$0xff] %vm1745, %v1532
        %1768 = vst.msk [vmem:[%s362 + $0xb0] sm:$0xff] %vm1745, %v1537
        %1769 = vst.msk [vmem:[%s362 + $0xb8] sm:$0xff] %vm1745, %v1542
        %1770 = vst.msk [vmem:[%s362 + $0xc0] sm:$0xff] %vm1745, %v1547
        %1771 = vst.msk [vmem:[%s362 + $0xc8] sm:$0xff] %vm1745, %v1552
        %1772 = vst.msk [vmem:[%s362 + $0xd0] sm:$0xff] %vm1745, %v1557
        %1773 = vst.msk [vmem:[%s362 + $0xd8] sm:$0xff] %vm1745, %v1562
        %1774 = vst.msk [vmem:[%s362 + $0xe0] sm:$0xff] %vm1745, %v1567
        %1775 = vst.msk [vmem:[%s362 + $0xe8] sm:$0xff] %vm1745, %v1572
        %1776 = vst.msk [vmem:[%s362 + $0xf0] sm:$0xff] %vm1745, %v1577
        %1777 = vst.msk [vmem:[%s362 + $0xf8] sm:$0xff] %vm1745, %v1582
        %1778 = vst.msk [vmem:[%s362 + $0x100] sm:$0xff] %vm1745, %v1587
        %1779 = vst.msk [vmem:[%s362 + $0x108] sm:$0xff] %vm1745, %v1592
        %1780 = vst.msk [vmem:[%s362 + $0x110] sm:$0xff] %vm1745, %v1597
        %1781 = vst.msk [vmem:[%s362 + $0x118] sm:$0xff] %vm1745, %v1602
        %1782 = vst.msk [vmem:[%s362 + $0x120] sm:$0xff] %vm1745, %v1607
        %1783 = vst.msk [vmem:[%s362 + $0x128] sm:$0xff] %vm1745, %v1612
        %1784 = vst.msk [vmem:[%s362 + $0x130] sm:$0xff] %vm1745, %v1617
        %1785 = vst.msk [vmem:[%s362 + $0x138] sm:$0xff] %vm1745, %v1622
        %1786 = vst.msk [vmem:[%s362 + $0x140] sm:$0xff] %vm1745, %v1627
        %1787 = vst.msk [vmem:[%s362 + $0x148] sm:$0xff] %vm1745, %v1632
        %1788 = vst.msk [vmem:[%s362 + $0x150] sm:$0xff] %vm1745, %v1637
        %1789 = vst.msk [vmem:[%s362 + $0x158] sm:$0xff] %vm1745, %v1642
        %1790 = vst.msk [vmem:[%s362 + $0x160] sm:$0xff] %vm1745, %v1647
        %1791 = vst.msk [vmem:[%s362 + $0x168] sm:$0xff] %vm1745, %v1652
        %1792 = vst.msk [vmem:[%s362 + $0x170] sm:$0xff] %vm1745, %v1657
        %1793 = vst.msk [vmem:[%s362 + $0x178] sm:$0xff] %vm1745, %v1662
        %1794 = vst.msk [vmem:[%s362 + $0x180] sm:$0xff] %vm1745, %v1667
        %1795 = vst.msk [vmem:[%s362 + $0x188] sm:$0xff] %vm1745, %v1672
        %1796 = vst.msk [vmem:[%s362 + $0x190] sm:$0xff] %vm1745, %v1677
        %1797 = vst.msk [vmem:[%s362 + $0x198] sm:$0xff] %vm1745, %v1682
        %1798 = vst.msk [vmem:[%s362 + $0x1a0] sm:$0xff] %vm1745, %v1687
        %1799 = vst.msk [vmem:[%s362 + $0x1a8] sm:$0xff] %vm1745, %v1692
        %1800 = vst.msk [vmem:[%s362 + $0x1b0] sm:$0xff] %vm1745, %v1697
        %1801 = vst.msk [vmem:[%s362 + $0x1b8] sm:$0xff] %vm1745, %v1702
        %1802 = vst.msk [vmem:[%s362 + $0x1c0] sm:$0xff] %vm1745, %v1707
        %1803 = vst.msk [vmem:[%s362 + $0x1c8] sm:$0xff] %vm1745, %v1712
        %1804 = vst.msk [vmem:[%s362 + $0x1d0] sm:$0xff] %vm1745, %v1717
        %1805 = vst.msk [vmem:[%s362 + $0x1d8] sm:$0xff] %vm1745, %v1722
        %1806 = vst.msk [vmem:[%s362 + $0x1e0] sm:$0xff] %vm1745, %v1727
        %1807 = vst.msk [vmem:[%s362 + $0x1e8] sm:$0xff] %vm1745, %v1732
        %1808 = vst.msk [vmem:[%s362 + $0x1f0] sm:$0xff] %vm1745, %v1737
        %1809 = vst.msk [vmem:[%s362 + $0x1f8] sm:$0xff] %vm1745, %v1742
        %v1810 = vld [vmem:[%s352] sm:$0xff]
        %v1811 = vld [vmem:[%s352 + $0x8] sm:$0xff]
        %v1812 = vld [vmem:[%s352 + $0x10] sm:$0xff]
        %v1813 = vld [vmem:[%s352 + $0x18] sm:$0xff]
        %v1814 = vld [vmem:[%s352 + $0x20] sm:$0xff]
        %v1815 = vld [vmem:[%s352 + $0x28] sm:$0xff]
        %v1816 = vld [vmem:[%s352 + $0x30] sm:$0xff]
        %v1817 = vld [vmem:[%s352 + $0x38] sm:$0xff]
        %v1818 = vld [vmem:[%s352 + $0x40] sm:$0xff]
        %v1819 = vld [vmem:[%s352 + $0x48] sm:$0xff]
        %v1820 = vld [vmem:[%s352 + $0x50] sm:$0xff]
        %v1821 = vld [vmem:[%s352 + $0x58] sm:$0xff]
        %v1822 = vld [vmem:[%s352 + $0x60] sm:$0xff]
        %v1823 = vld [vmem:[%s352 + $0x68] sm:$0xff]
        %v1824 = vld [vmem:[%s352 + $0x70] sm:$0xff]
        %v1825 = vld [vmem:[%s352 + $0x78] sm:$0xff]
        %1826 = vmatprep.subr.mxu0 0.0
        %1827 = vmatpush1.msra.mxu0 %v1825
        %1828 = vmatprep.subr.mxu0 0.0
        %1829 = vmatpush1.msra.mxu0 %v1824
        %1830 = vmatprep.subr.mxu0 0.0
        %1831 = vmatpush1.msra.mxu0 %v1823
        %1832 = vmatprep.subr.mxu0 0.0
        %1833 = vmatpush1.msra.mxu0 %v1822
        %1834 = vmatprep.subr.mxu0 0.0
        %1835 = vmatpush1.msra.mxu0 %v1821
        %1836 = vmatprep.subr.mxu0 0.0
        %1837 = vmatpush1.msra.mxu0 %v1820
        %1838 = vmatprep.subr.mxu0 0.0
        %1839 = vmatpush1.msra.mxu0 %v1819
        %1840 = vmatprep.subr.mxu0 0.0
        %1841 = vmatpush1.msra.mxu0 %v1818
        %1842 = vmatprep.subr.mxu0 0.0
        %1843 = vmatpush1.msra.mxu0 %v1817
        %1844 = vmatprep.subr.mxu0 0.0
        %1845 = vmatpush1.msra.mxu0 %v1816
        %1846 = vmatprep.subr.mxu0 0.0
        %1847 = vmatpush1.msra.mxu0 %v1815
        %1848 = vmatprep.subr.mxu0 0.0
        %1849 = vmatpush1.msra.mxu0 %v1814
        %1850 = vmatprep.subr.mxu0 0.0
        %1851 = vmatpush1.msra.mxu0 %v1813
        %1852 = vmatprep.subr.mxu0 0.0
        %1853 = vmatpush1.msra.mxu0 %v1812
        %1854 = vmatprep.subr.mxu0 0.0
        %1855 = vmatpush1.msra.mxu0 %v1811
        %1856 = vmatprep.subr.mxu0 0.0
        %1857 = vmatpush1.msra.mxu0 %v1810
        %1858 = vmatprep.subr.mxu0 0.0
        %1859 = vmatpush2.msra.mxu0 0.0
        %1860 = vmatprep.subr.mxu0 0.0
        %1861 = vmatpush2.msra.mxu0 0.0
        %1862 = vmatprep.subr.mxu0 0.0
        %1863 = vmatpush2.msra.mxu0 0.0
        %1864 = vmatprep.subr.mxu0 0.0
        %1865 = vmatpush2.msra.mxu0 0.0
        %1866 = vmatprep.subr.mxu0 0.0
        %1867 = vmatpush2.msra.mxu0 0.0
        %1868 = vmatprep.subr.mxu0 0.0
        %1869 = vmatpush2.msra.mxu0 0.0
        %1870 = vmatprep.subr.mxu0 0.0
        %1871 = vmatpush2.msra.mxu0 0.0
        %1872 = vmatprep.subr.mxu0 0.0
        %1873 = vmatpush2.msra.mxu0 0.0
        %1874 = vmatprep.subr.mxu0 0.0
        %1875 = vmatpush2.msra.mxu0 0.0
        %1876 = vmatprep.subr.mxu0 0.0
        %1877 = vmatpush2.msra.mxu0 0.0
        %1878 = vmatprep.subr.mxu0 0.0
        %1879 = vmatpush2.msra.mxu0 0.0
        %1880 = vmatprep.subr.mxu0 0.0
        %1881 = vmatpush2.msra.mxu0 0.0
        %1882 = vmatprep.subr.mxu0 0.0
        %1883 = vmatpush2.msra.mxu0 0.0
        %1884 = vmatprep.subr.mxu0 0.0
        %1885 = vmatpush2.msra.mxu0 0.0
        %1886 = vmatprep.subr.mxu0 0.0
        %1887 = vmatpush2.msra.mxu0 0.0
        %1888 = vmatprep.subr.mxu0 0.0
        %1889 = vmatpush2.msra.mxu0 0.0
        %1890 = vmatprep.mubr.f32.mxu0 0.0
        %1891 = vmatmul.mubr.f32.gmra.mxu0 %v706
        %v1892 = vpop.f32.mrf.mxu0
        %v1893 = vadd.f32 0.0, %v1892
        %v1894 = vpop.f32.mrf.mxu0
        %1895 = vmatprep.mubr.f32.mxu0 0.0
        %1896 = vmatmul.mubr.f32.gmra.mxu0 %v711
        %v1897 = vpop.f32.mrf.mxu0
        %v1898 = vadd.f32 0.0, %v1897
        %v1899 = vpop.f32.mrf.mxu0
        %1900 = vmatprep.mubr.f32.mxu0 0.0
        %1901 = vmatmul.mubr.f32.gmra.mxu0 %v716
        %v1902 = vpop.f32.mrf.mxu0
        %v1903 = vadd.f32 0.0, %v1902
        %v1904 = vpop.f32.mrf.mxu0
        %1905 = vmatprep.mubr.f32.mxu0 0.0
        %1906 = vmatmul.mubr.f32.gmra.mxu0 %v721
        %v1907 = vpop.f32.mrf.mxu0
        %v1908 = vadd.f32 0.0, %v1907
        %v1909 = vpop.f32.mrf.mxu0
        %1910 = vmatprep.mubr.f32.mxu0 0.0
        %1911 = vmatmul.mubr.f32.gmra.mxu0 %v726
        %v1912 = vpop.f32.mrf.mxu0
        %v1913 = vadd.f32 0.0, %v1912
        %v1914 = vpop.f32.mrf.mxu0
        %1915 = vmatprep.mubr.f32.mxu0 0.0
        %1916 = vmatmul.mubr.f32.gmra.mxu0 %v731
        %v1917 = vpop.f32.mrf.mxu0
        %v1918 = vadd.f32 0.0, %v1917
        %v1919 = vpop.f32.mrf.mxu0
        %1920 = vmatprep.mubr.f32.mxu0 0.0
        %1921 = vmatmul.mubr.f32.gmra.mxu0 %v736
        %v1922 = vpop.f32.mrf.mxu0
        %v1923 = vadd.f32 0.0, %v1922
        %v1924 = vpop.f32.mrf.mxu0
        %1925 = vmatprep.mubr.f32.mxu0 0.0
        %1926 = vmatmul.mubr.f32.gmra.mxu0 %v741
        %v1927 = vpop.f32.mrf.mxu0
        %v1928 = vadd.f32 0.0, %v1927
        %v1929 = vpop.f32.mrf.mxu0
        %1930 = vmatprep.mubr.f32.mxu0 0.0
        %1931 = vmatmul.mubr.f32.gmra.mxu0 %v746
        %v1932 = vpop.f32.mrf.mxu0
        %v1933 = vadd.f32 0.0, %v1932
        %v1934 = vpop.f32.mrf.mxu0
        %1935 = vmatprep.mubr.f32.mxu0 0.0
        %1936 = vmatmul.mubr.f32.gmra.mxu0 %v751
        %v1937 = vpop.f32.mrf.mxu0
        %v1938 = vadd.f32 0.0, %v1937
        %v1939 = vpop.f32.mrf.mxu0
        %1940 = vmatprep.mubr.f32.mxu0 0.0
        %1941 = vmatmul.mubr.f32.gmra.mxu0 %v756
        %v1942 = vpop.f32.mrf.mxu0
        %v1943 = vadd.f32 0.0, %v1942
        %v1944 = vpop.f32.mrf.mxu0
        %1945 = vmatprep.mubr.f32.mxu0 0.0
        %1946 = vmatmul.mubr.f32.gmra.mxu0 %v761
        %v1947 = vpop.f32.mrf.mxu0
        %v1948 = vadd.f32 0.0, %v1947
        %v1949 = vpop.f32.mrf.mxu0
        %1950 = vmatprep.mubr.f32.mxu0 0.0
        %1951 = vmatmul.mubr.f32.gmra.mxu0 %v766
        %v1952 = vpop.f32.mrf.mxu0
        %v1953 = vadd.f32 0.0, %v1952
        %v1954 = vpop.f32.mrf.mxu0
        %1955 = vmatprep.mubr.f32.mxu0 0.0
        %1956 = vmatmul.mubr.f32.gmra.mxu0 %v771
        %v1957 = vpop.f32.mrf.mxu0
        %v1958 = vadd.f32 0.0, %v1957
        %v1959 = vpop.f32.mrf.mxu0
        %1960 = vmatprep.mubr.f32.mxu0 0.0
        %1961 = vmatmul.mubr.f32.gmra.mxu0 %v776
        %v1962 = vpop.f32.mrf.mxu0
        %v1963 = vadd.f32 0.0, %v1962
        %v1964 = vpop.f32.mrf.mxu0
        %1965 = vmatprep.mubr.f32.mxu0 0.0
        %1966 = vmatmul.mubr.f32.gmra.mxu0 %v781
        %v1967 = vpop.f32.mrf.mxu0
        %v1968 = vadd.f32 0.0, %v1967
        %v1969 = vpop.f32.mrf.mxu0
        %1970 = vmatprep.mubr.f32.mxu0 0.0
        %1971 = vmatmul.mubr.f32.gmra.mxu0 %v786
        %v1972 = vpop.f32.mrf.mxu0
        %v1973 = vadd.f32 0.0, %v1972
        %v1974 = vpop.f32.mrf.mxu0
        %1975 = vmatprep.mubr.f32.mxu0 0.0
        %1976 = vmatmul.mubr.f32.gmra.mxu0 %v791
        %v1977 = vpop.f32.mrf.mxu0
        %v1978 = vadd.f32 0.0, %v1977
        %v1979 = vpop.f32.mrf.mxu0
        %1980 = vmatprep.mubr.f32.mxu0 0.0
        %1981 = vmatmul.mubr.f32.gmra.mxu0 %v796
        %v1982 = vpop.f32.mrf.mxu0
        %v1983 = vadd.f32 0.0, %v1982
        %v1984 = vpop.f32.mrf.mxu0
        %1985 = vmatprep.mubr.f32.mxu0 0.0
        %1986 = vmatmul.mubr.f32.gmra.mxu0 %v801
        %v1987 = vpop.f32.mrf.mxu0
        %v1988 = vadd.f32 0.0, %v1987
        %v1989 = vpop.f32.mrf.mxu0
        %1990 = vmatprep.mubr.f32.mxu0 0.0
        %1991 = vmatmul.mubr.f32.gmra.mxu0 %v806
        %v1992 = vpop.f32.mrf.mxu0
        %v1993 = vadd.f32 0.0, %v1992
        %v1994 = vpop.f32.mrf.mxu0
        %1995 = vmatprep.mubr.f32.mxu0 0.0
        %1996 = vmatmul.mubr.f32.gmra.mxu0 %v811
        %v1997 = vpop.f32.mrf.mxu0
        %v1998 = vadd.f32 0.0, %v1997
        %v1999 = vpop.f32.mrf.mxu0
        %2000 = vmatprep.mubr.f32.mxu0 0.0
        %2001 = vmatmul.mubr.f32.gmra.mxu0 %v816
        %v2002 = vpop.f32.mrf.mxu0
        %v2003 = vadd.f32 0.0, %v2002
        %v2004 = vpop.f32.mrf.mxu0
        %2005 = vmatprep.mubr.f32.mxu0 0.0
        %2006 = vmatmul.mubr.f32.gmra.mxu0 %v821
        %v2007 = vpop.f32.mrf.mxu0
        %v2008 = vadd.f32 0.0, %v2007
        %v2009 = vpop.f32.mrf.mxu0
        %2010 = vmatprep.mubr.f32.mxu0 0.0
        %2011 = vmatmul.mubr.f32.gmra.mxu0 %v826
        %v2012 = vpop.f32.mrf.mxu0
        %v2013 = vadd.f32 0.0, %v2012
        %v2014 = vpop.f32.mrf.mxu0
        %2015 = vmatprep.mubr.f32.mxu0 0.0
        %2016 = vmatmul.mubr.f32.gmra.mxu0 %v831
        %v2017 = vpop.f32.mrf.mxu0
        %v2018 = vadd.f32 0.0, %v2017
        %v2019 = vpop.f32.mrf.mxu0
        %2020 = vmatprep.mubr.f32.mxu0 0.0
        %2021 = vmatmul.mubr.f32.gmra.mxu0 %v836
        %v2022 = vpop.f32.mrf.mxu0
        %v2023 = vadd.f32 0.0, %v2022
        %v2024 = vpop.f32.mrf.mxu0
        %2025 = vmatprep.mubr.f32.mxu0 0.0
        %2026 = vmatmul.mubr.f32.gmra.mxu0 %v841
        %v2027 = vpop.f32.mrf.mxu0
        %v2028 = vadd.f32 0.0, %v2027
        %v2029 = vpop.f32.mrf.mxu0
        %2030 = vmatprep.mubr.f32.mxu0 0.0
        %2031 = vmatmul.mubr.f32.gmra.mxu0 %v846
        %v2032 = vpop.f32.mrf.mxu0
        %v2033 = vadd.f32 0.0, %v2032
        %v2034 = vpop.f32.mrf.mxu0
        %2035 = vmatprep.mubr.f32.mxu0 0.0
        %2036 = vmatmul.mubr.f32.gmra.mxu0 %v851
        %v2037 = vpop.f32.mrf.mxu0
        %v2038 = vadd.f32 0.0, %v2037
        %v2039 = vpop.f32.mrf.mxu0
        %2040 = vmatprep.mubr.f32.mxu0 0.0
        %2041 = vmatmul.mubr.f32.gmra.mxu0 %v856
        %v2042 = vpop.f32.mrf.mxu0
        %v2043 = vadd.f32 0.0, %v2042
        %v2044 = vpop.f32.mrf.mxu0
        %2045 = vmatprep.mubr.f32.mxu0 0.0
        %2046 = vmatmul.mubr.f32.gmra.mxu0 %v861
        %v2047 = vpop.f32.mrf.mxu0
        %v2048 = vadd.f32 0.0, %v2047
        %v2049 = vpop.f32.mrf.mxu0
        %2050 = vmatprep.mubr.f32.mxu0 0.0
        %2051 = vmatmul.mubr.f32.gmra.mxu0 %v866
        %v2052 = vpop.f32.mrf.mxu0
        %v2053 = vadd.f32 0.0, %v2052
        %v2054 = vpop.f32.mrf.mxu0
        %2055 = vmatprep.mubr.f32.mxu0 0.0
        %2056 = vmatmul.mubr.f32.gmra.mxu0 %v871
        %v2057 = vpop.f32.mrf.mxu0
        %v2058 = vadd.f32 0.0, %v2057
        %v2059 = vpop.f32.mrf.mxu0
        %2060 = vmatprep.mubr.f32.mxu0 0.0
        %2061 = vmatmul.mubr.f32.gmra.mxu0 %v876
        %v2062 = vpop.f32.mrf.mxu0
        %v2063 = vadd.f32 0.0, %v2062
        %v2064 = vpop.f32.mrf.mxu0
        %2065 = vmatprep.mubr.f32.mxu0 0.0
        %2066 = vmatmul.mubr.f32.gmra.mxu0 %v881
        %v2067 = vpop.f32.mrf.mxu0
        %v2068 = vadd.f32 0.0, %v2067
        %v2069 = vpop.f32.mrf.mxu0
        %2070 = vmatprep.mubr.f32.mxu0 0.0
        %2071 = vmatmul.mubr.f32.gmra.mxu0 %v886
        %v2072 = vpop.f32.mrf.mxu0
        %v2073 = vadd.f32 0.0, %v2072
        %v2074 = vpop.f32.mrf.mxu0
        %2075 = vmatprep.mubr.f32.mxu0 0.0
        %2076 = vmatmul.mubr.f32.gmra.mxu0 %v891
        %v2077 = vpop.f32.mrf.mxu0
        %v2078 = vadd.f32 0.0, %v2077
        %v2079 = vpop.f32.mrf.mxu0
        %2080 = vmatprep.mubr.f32.mxu0 0.0
        %2081 = vmatmul.mubr.f32.gmra.mxu0 %v896
        %v2082 = vpop.f32.mrf.mxu0
        %v2083 = vadd.f32 0.0, %v2082
        %v2084 = vpop.f32.mrf.mxu0
        %2085 = vmatprep.mubr.f32.mxu0 0.0
        %2086 = vmatmul.mubr.f32.gmra.mxu0 %v901
        %v2087 = vpop.f32.mrf.mxu0
        %v2088 = vadd.f32 0.0, %v2087
        %v2089 = vpop.f32.mrf.mxu0
        %2090 = vmatprep.mubr.f32.mxu0 0.0
        %2091 = vmatmul.mubr.f32.gmra.mxu0 %v906
        %v2092 = vpop.f32.mrf.mxu0
        %v2093 = vadd.f32 0.0, %v2092
        %v2094 = vpop.f32.mrf.mxu0
        %2095 = vmatprep.mubr.f32.mxu0 0.0
        %2096 = vmatmul.mubr.f32.gmra.mxu0 %v911
        %v2097 = vpop.f32.mrf.mxu0
        %v2098 = vadd.f32 0.0, %v2097
        %v2099 = vpop.f32.mrf.mxu0
        %2100 = vmatprep.mubr.f32.mxu0 0.0
        %2101 = vmatmul.mubr.f32.gmra.mxu0 %v916
        %v2102 = vpop.f32.mrf.mxu0
        %v2103 = vadd.f32 0.0, %v2102
        %v2104 = vpop.f32.mrf.mxu0
        %2105 = vmatprep.mubr.f32.mxu0 0.0
        %2106 = vmatmul.mubr.f32.gmra.mxu0 %v921
        %v2107 = vpop.f32.mrf.mxu0
        %v2108 = vadd.f32 0.0, %v2107
        %v2109 = vpop.f32.mrf.mxu0
        %2110 = vmatprep.mubr.f32.mxu0 0.0
        %2111 = vmatmul.mubr.f32.gmra.mxu0 %v926
        %v2112 = vpop.f32.mrf.mxu0
        %v2113 = vadd.f32 0.0, %v2112
        %v2114 = vpop.f32.mrf.mxu0
        %2115 = vmatprep.mubr.f32.mxu0 0.0
        %2116 = vmatmul.mubr.f32.gmra.mxu0 %v931
        %v2117 = vpop.f32.mrf.mxu0
        %v2118 = vadd.f32 0.0, %v2117
        %v2119 = vpop.f32.mrf.mxu0
        %2120 = vmatprep.mubr.f32.mxu0 0.0
        %2121 = vmatmul.mubr.f32.gmra.mxu0 %v936
        %v2122 = vpop.f32.mrf.mxu0
        %v2123 = vadd.f32 0.0, %v2122
        %v2124 = vpop.f32.mrf.mxu0
        %2125 = vmatprep.mubr.f32.mxu0 0.0
        %2126 = vmatmul.mubr.f32.gmra.mxu0 %v941
        %v2127 = vpop.f32.mrf.mxu0
        %v2128 = vadd.f32 0.0, %v2127
        %v2129 = vpop.f32.mrf.mxu0
        %2130 = vmatprep.mubr.f32.mxu0 0.0
        %2131 = vmatmul.mubr.f32.gmra.mxu0 %v946
        %v2132 = vpop.f32.mrf.mxu0
        %v2133 = vadd.f32 0.0, %v2132
        %v2134 = vpop.f32.mrf.mxu0
        %2135 = vmatprep.mubr.f32.mxu0 0.0
        %2136 = vmatmul.mubr.f32.gmra.mxu0 %v951
        %v2137 = vpop.f32.mrf.mxu0
        %v2138 = vadd.f32 0.0, %v2137
        %v2139 = vpop.f32.mrf.mxu0
        %2140 = vmatprep.mubr.f32.mxu0 0.0
        %2141 = vmatmul.mubr.f32.gmra.mxu0 %v956
        %v2142 = vpop.f32.mrf.mxu0
        %v2143 = vadd.f32 0.0, %v2142
        %v2144 = vpop.f32.mrf.mxu0
        %2145 = vmatprep.mubr.f32.mxu0 0.0
        %2146 = vmatmul.mubr.f32.gmra.mxu0 %v961
        %v2147 = vpop.f32.mrf.mxu0
        %v2148 = vadd.f32 0.0, %v2147
        %v2149 = vpop.f32.mrf.mxu0
        %2150 = vmatprep.mubr.f32.mxu0 0.0
        %2151 = vmatmul.mubr.f32.gmra.mxu0 %v966
        %v2152 = vpop.f32.mrf.mxu0
        %v2153 = vadd.f32 0.0, %v2152
        %v2154 = vpop.f32.mrf.mxu0
        %2155 = vmatprep.mubr.f32.mxu0 0.0
        %2156 = vmatmul.mubr.f32.gmra.mxu0 %v971
        %v2157 = vpop.f32.mrf.mxu0
        %v2158 = vadd.f32 0.0, %v2157
        %v2159 = vpop.f32.mrf.mxu0
        %2160 = vmatprep.mubr.f32.mxu0 0.0
        %2161 = vmatmul.mubr.f32.gmra.mxu0 %v976
        %v2162 = vpop.f32.mrf.mxu0
        %v2163 = vadd.f32 0.0, %v2162
        %v2164 = vpop.f32.mrf.mxu0
        %2165 = vmatprep.mubr.f32.mxu0 0.0
        %2166 = vmatmul.mubr.f32.gmra.mxu0 %v981
        %v2167 = vpop.f32.mrf.mxu0
        %v2168 = vadd.f32 0.0, %v2167
        %v2169 = vpop.f32.mrf.mxu0
        %2170 = vmatprep.mubr.f32.mxu0 0.0
        %2171 = vmatmul.mubr.f32.gmra.mxu0 %v986
        %v2172 = vpop.f32.mrf.mxu0
        %v2173 = vadd.f32 0.0, %v2172
        %v2174 = vpop.f32.mrf.mxu0
        %2175 = vmatprep.mubr.f32.mxu0 0.0
        %2176 = vmatmul.mubr.f32.gmra.mxu0 %v991
        %v2177 = vpop.f32.mrf.mxu0
        %v2178 = vadd.f32 0.0, %v2177
        %v2179 = vpop.f32.mrf.mxu0
        %2180 = vmatprep.mubr.f32.mxu0 0.0
        %2181 = vmatmul.mubr.f32.gmra.mxu0 %v996
        %v2182 = vpop.f32.mrf.mxu0
        %v2183 = vadd.f32 0.0, %v2182
        %v2184 = vpop.f32.mrf.mxu0
        %2185 = vmatprep.mubr.f32.mxu0 0.0
        %2186 = vmatmul.mubr.f32.gmra.mxu0 %v1001
        %v2187 = vpop.f32.mrf.mxu0
        %v2188 = vadd.f32 0.0, %v2187
        %v2189 = vpop.f32.mrf.mxu0
        %2190 = vmatprep.mubr.f32.mxu0 0.0
        %2191 = vmatmul.mubr.f32.gmra.mxu0 %v1006
        %v2192 = vpop.f32.mrf.mxu0
        %v2193 = vadd.f32 0.0, %v2192
        %v2194 = vpop.f32.mrf.mxu0
        %2195 = vmatprep.mubr.f32.mxu0 0.0
        %2196 = vmatmul.mubr.f32.gmra.mxu0 %v1011
        %v2197 = vpop.f32.mrf.mxu0
        %v2198 = vadd.f32 0.0, %v2197
        %v2199 = vpop.f32.mrf.mxu0
        %2200 = vmatprep.mubr.f32.mxu0 0.0
        %2201 = vmatmul.mubr.f32.gmra.mxu0 %v1016
        %v2202 = vpop.f32.mrf.mxu0
        %v2203 = vadd.f32 0.0, %v2202
        %v2204 = vpop.f32.mrf.mxu0
        %2205 = vmatprep.mubr.f32.mxu0 0.0
        %2206 = vmatmul.mubr.f32.gmra.mxu0 %v1021
        %v2207 = vpop.f32.mrf.mxu0
        %v2208 = vadd.f32 0.0, %v2207
        %v2209 = vpop.f32.mrf.mxu0
        %2210 = vdwg.mxu0
        %2211 = vst.msk [vmem:[%s372] sm:$0xff] %vm1745, %v1893
        %2212 = vst.msk [vmem:[%s372 + $0x8] sm:$0xff] %vm1745, %v1898
        %2213 = vst.msk [vmem:[%s372 + $0x10] sm:$0xff] %vm1745, %v1903
        %2214 = vst.msk [vmem:[%s372 + $0x18] sm:$0xff] %vm1745, %v1908
        %2215 = vst.msk [vmem:[%s372 + $0x20] sm:$0xff] %vm1745, %v1913
        %2216 = vst.msk [vmem:[%s372 + $0x28] sm:$0xff] %vm1745, %v1918
        %2217 = vst.msk [vmem:[%s372 + $0x30] sm:$0xff] %vm1745, %v1923
        %2218 = vst.msk [vmem:[%s372 + $0x38] sm:$0xff] %vm1745, %v1928
        %2219 = vst.msk [vmem:[%s372 + $0x40] sm:$0xff] %vm1745, %v1933
        %2220 = vst.msk [vmem:[%s372 + $0x48] sm:$0xff] %vm1745, %v1938
        %2221 = vst.msk [vmem:[%s372 + $0x50] sm:$0xff] %vm1745, %v1943
        %2222 = vst.msk [vmem:[%s372 + $0x58] sm:$0xff] %vm1745, %v1948
        %2223 = vst.msk [vmem:[%s372 + $0x60] sm:$0xff] %vm1745, %v1953
        %2224 = vst.msk [vmem:[%s372 + $0x68] sm:$0xff] %vm1745, %v1958
        %2225 = vst.msk [vmem:[%s372 + $0x70] sm:$0xff] %vm1745, %v1963
        %2226 = vst.msk [vmem:[%s372 + $0x78] sm:$0xff] %vm1745, %v1968
        %2227 = vst.msk [vmem:[%s372 + $0x80] sm:$0xff] %vm1745, %v1973
        %2228 = vst.msk [vmem:[%s372 + $0x88] sm:$0xff] %vm1745, %v1978
        %2229 = vst.msk [vmem:[%s372 + $0x90] sm:$0xff] %vm1745, %v1983
        %2230 = vst.msk [vmem:[%s372 + $0x98] sm:$0xff] %vm1745, %v1988
        %2231 = vst.msk [vmem:[%s372 + $0xa0] sm:$0xff] %vm1745, %v1993
        %2232 = vst.msk [vmem:[%s372 + $0xa8] sm:$0xff] %vm1745, %v1998
        %2233 = vst.msk [vmem:[%s372 + $0xb0] sm:$0xff] %vm1745, %v2003
        %2234 = vst.msk [vmem:[%s372 + $0xb8] sm:$0xff] %vm1745, %v2008
        %2235 = vst.msk [vmem:[%s372 + $0xc0] sm:$0xff] %vm1745, %v2013
        %2236 = vst.msk [vmem:[%s372 + $0xc8] sm:$0xff] %vm1745, %v2018
        %2237 = vst.msk [vmem:[%s372 + $0xd0] sm:$0xff] %vm1745, %v2023
        %2238 = vst.msk [vmem:[%s372 + $0xd8] sm:$0xff] %vm1745, %v2028
        %2239 = vst.msk [vmem:[%s372 + $0xe0] sm:$0xff] %vm1745, %v2033
        %2240 = vst.msk [vmem:[%s372 + $0xe8] sm:$0xff] %vm1745, %v2038
        %2241 = vst.msk [vmem:[%s372 + $0xf0] sm:$0xff] %vm1745, %v2043
        %2242 = vst.msk [vmem:[%s372 + $0xf8] sm:$0xff] %vm1745, %v2048
        %2243 = vst.msk [vmem:[%s372 + $0x100] sm:$0xff] %vm1745, %v2053
        %2244 = vst.msk [vmem:[%s372 + $0x108] sm:$0xff] %vm1745, %v2058
        %2245 = vst.msk [vmem:[%s372 + $0x110] sm:$0xff] %vm1745, %v2063
        %2246 = vst.msk [vmem:[%s372 + $0x118] sm:$0xff] %vm1745, %v2068
        %2247 = vst.msk [vmem:[%s372 + $0x120] sm:$0xff] %vm1745, %v2073
        %2248 = vst.msk [vmem:[%s372 + $0x128] sm:$0xff] %vm1745, %v2078
        %2249 = vst.msk [vmem:[%s372 + $0x130] sm:$0xff] %vm1745, %v2083
        %2250 = vst.msk [vmem:[%s372 + $0x138] sm:$0xff] %vm1745, %v2088
        %2251 = vst.msk [vmem:[%s372 + $0x140] sm:$0xff] %vm1745, %v2093
        %2252 = vst.msk [vmem:[%s372 + $0x148] sm:$0xff] %vm1745, %v2098
        %2253 = vst.msk [vmem:[%s372 + $0x150] sm:$0xff] %vm1745, %v2103
        %2254 = vst.msk [vmem:[%s372 + $0x158] sm:$0xff] %vm1745, %v2108
        %2255 = vst.msk [vmem:[%s372 + $0x160] sm:$0xff] %vm1745, %v2113
        %2256 = vst.msk [vmem:[%s372 + $0x168] sm:$0xff] %vm1745, %v2118
        %2257 = vst.msk [vmem:[%s372 + $0x170] sm:$0xff] %vm1745, %v2123
        %2258 = vst.msk [vmem:[%s372 + $0x178] sm:$0xff] %vm1745, %v2128
        %2259 = vst.msk [vmem:[%s372 + $0x180] sm:$0xff] %vm1745, %v2133
        %2260 = vst.msk [vmem:[%s372 + $0x188] sm:$0xff] %vm1745, %v2138
        %2261 = vst.msk [vmem:[%s372 + $0x190] sm:$0xff] %vm1745, %v2143
        %2262 = vst.msk [vmem:[%s372 + $0x198] sm:$0xff] %vm1745, %v2148
        %2263 = vst.msk [vmem:[%s372 + $0x1a0] sm:$0xff] %vm1745, %v2153
        %2264 = vst.msk [vmem:[%s372 + $0x1a8] sm:$0xff] %vm1745, %v2158
        %2265 = vst.msk [vmem:[%s372 + $0x1b0] sm:$0xff] %vm1745, %v2163
        %2266 = vst.msk [vmem:[%s372 + $0x1b8] sm:$0xff] %vm1745, %v2168
        %2267 = vst.msk [vmem:[%s372 + $0x1c0] sm:$0xff] %vm1745, %v2173
        %2268 = vst.msk [vmem:[%s372 + $0x1c8] sm:$0xff] %vm1745, %v2178
        %2269 = vst.msk [vmem:[%s372 + $0x1d0] sm:$0xff] %vm1745, %v2183
        %2270 = vst.msk [vmem:[%s372 + $0x1d8] sm:$0xff] %vm1745, %v2188
        %2271 = vst.msk [vmem:[%s372 + $0x1e0] sm:$0xff] %vm1745, %v2193
        %2272 = vst.msk [vmem:[%s372 + $0x1e8] sm:$0xff] %vm1745, %v2198
        %2273 = vst.msk [vmem:[%s372 + $0x1f0] sm:$0xff] %vm1745, %v2203
        %2274 = vst.msk [vmem:[%s372 + $0x1f8] sm:$0xff] %vm1745, %v2208
        %s2275 = sand.u32 %s147, 1
        %s2276 = scalar_lea.sflag [#allocation3], %s2275
        %s2277 = sand.u32 %s147, 1
        %s2278 = smul.addr %s2277, 256
        %s2279 = scalar_lea.vmem [#allocation2], %s2278
        %s2280 = smul.u32 64, %s26
        %p2281 = scmp.lt.s32.totalorder %s25, 1
        %s2282 = scalar_select %p2281, %s25, 1
        %p2283 = scmp.lt.s32.totalorder %s2280, 63
        %s2284 = scalar_select %p2283, %s2280, 63
        %s2285 = smul.addr %s2282, 64
        %s2286 = sadd.s32 %s2284, %s2285
        %s2287 = smul.addr %s2286, 8
        %s2288 = scalar_lea.vmem %s5, %s2287
        %s2289 = smul.u32 64, %s26
        %p2290 = scmp.lt.s32.totalorder %s25, 1
        %s2291 = scalar_select %p2290, %s25, 1
        %p2292 = scmp.lt.s32.totalorder %s2289, 63
        %s2293 = scalar_select %p2292, %s2289, 63
        %s2294 = smul.addr %s2291, 64
        %s2295 = sadd.s32 %s2293, %s2294
        %s2296 = smul.addr %s2295, 8
        %s2297 = scalar_lea.vmem %s6, %s2296
        // Predicated region
        $region37: #{tpu_custom_call.1} parent=35 // pred_check
          %p2298 = pneg %p157
        $region38: #{tpu_custom_call.1} parent=35 // pred_check_branch
          %2300 = sbr.rel (%p2298) target = $region40
        $region39: #{tpu_custom_call.1} parent=35 // pred_region
          %s2301 = smul.u32 64, %s26
          %s2303 = ssub.s32 4096, 4096
          %2304 = vsyncadd %s2276, %s2303
          %s2305 = smul.addr %s25, 64
          %s2306 = sadd.s32 %s2301, %s2305
          %s2307 = smul.addr %s2306, 64
          %s2308 = scalar_lea.hbm %s4, %s2307
          %s2309 = sshll.u32 %s2279, 4
          %s2310 = int_to_ptr.vmem [resolvable:$true] %s2309
          %2315 = dma.vmem_to_hbm [thread:$0]  %s2310, 4096, %s2308, %s2276, 64, 64, 4
        $region40: #{tpu_custom_call.1} parent=35 // pred_fallthru
          _
        // Predicated region
        $region41: #{tpu_custom_call.1} parent=35 // pred_check
          %p2316 = pneg %p185
        $region42: #{tpu_custom_call.1} parent=35 // pred_check_branch
          %2318 = sbr.rel (%p2316) target = $region44
        $region43: #{tpu_custom_call.1} parent=35 // pred_region
          %s2319 = smul.u32 64, %s26
        $region44: #{tpu_custom_call.1} parent=35 // pred_fallthru
          _
        // Predicated region
        $region45: #{tpu_custom_call.1} parent=35 // pred_check
          %p2320 = pneg %p213
        $region46: #{tpu_custom_call.1} parent=35 // pred_check_branch
          %2322 = sbr.rel (%p2320) target = $region48
        $region47: #{tpu_custom_call.1} parent=35 // pred_region
          %s2323 = smul.u32 64, %s26
        $region48: #{tpu_custom_call.1} parent=35 // pred_fallthru
          _
      $region36: #{tpu_custom_call.1} parent=5 // pred_fallthru
        _
      %p2324 = scmp.le.s32.totalorder 2, %s16
      // Predicated region
      $region49: #{tpu_custom_call.1} parent=5 // pred_check
        %p2325 = pneg %p2324
      $region50: #{tpu_custom_call.1} parent=5 // pred_check_branch
        %2327 = sbr.rel (%p2325) target = $region52
      $region51: #{tpu_custom_call.1} parent=5 // pred_region
        %s2328 = ssub.s32 %s16, 2
        // Predicated region
        $region53: #{tpu_custom_call.1} parent=51 // pred_check
          %p2329 = pneg %p163
        $region54: #{tpu_custom_call.1} parent=51 // pred_check_branch
          %2331 = sbr.rel (%p2329) target = $region56
        $region55: #{tpu_custom_call.1} parent=51 // pred_region
          %s2332 = sand.u32 %s148, 1
          %s2333 = scalar_lea.sflag [#allocation3], %s2332
          %s2334 = sand.u32 %s148, 1
          %s2335 = smul.addr %s2334, 256
          %s2336 = scalar_lea.vmem [#allocation2], %s2335
          %2337 = dma.done %s2333, 4096
        $region56: #{tpu_custom_call.1} parent=51 // pred_fallthru
          _
        // Predicated region
        $region57: #{tpu_custom_call.1} parent=51 // pred_check
          %p2338 = pneg %p191
        $region58: #{tpu_custom_call.1} parent=51 // pred_check_branch
          %2340 = sbr.rel (%p2338) target = $region60
        $region59: #{tpu_custom_call.1} parent=51 // pred_region
          %s2341 = smul.u32 64, %s28
          %p2342 = scmp.lt.s32.totalorder %s27, 1
          %s2343 = scalar_select %p2342, %s27, 1
          %p2344 = scmp.lt.s32.totalorder %s2341, 63
          %s2345 = scalar_select %p2344, %s2341, 63
          %s2346 = smul.addr %s2343, 64
          %s2347 = sadd.s32 %s2345, %s2346
          %s2348 = smul.addr %s2347, 8
          %s2349 = scalar_lea.vmem %s5, %s2348
        $region60: #{tpu_custom_call.1} parent=51 // pred_fallthru
          _
        // Predicated region
        $region61: #{tpu_custom_call.1} parent=51 // pred_check
          %p2350 = pneg %p219
        $region62: #{tpu_custom_call.1} parent=51 // pred_check_branch
          %2352 = sbr.rel (%p2350) target = $region64
        $region63: #{tpu_custom_call.1} parent=51 // pred_region
          %s2353 = smul.u32 64, %s28
          %p2354 = scmp.lt.s32.totalorder %s27, 1
          %s2355 = scalar_select %p2354, %s27, 1
          %p2356 = scmp.lt.s32.totalorder %s2353, 63
          %s2357 = scalar_select %p2356, %s2353, 63
          %s2358 = smul.addr %s2355, 64
          %s2359 = sadd.s32 %s2357, %s2358
          %s2360 = smul.addr %s2359, 8
          %s2361 = scalar_lea.vmem %s6, %s2360
        $region64: #{tpu_custom_call.1} parent=51 // pred_fallthru
          _
      $region52: #{tpu_custom_call.1} parent=5 // pred_fallthru
        _
    $region6: #{tpu_custom_call.1} parent=1 // loop_footer
      %s20 = sadd.s32 1, %s16
    $region7: #{tpu_custom_call.1} parent=1 // loop_footer_branch
      %15 = sbr.rel target = $region3
    $region8: #{tpu_custom_call.1} parent=1 // loop_exit
      _
    %2362 = vsyncpa [#allocation3], 1
    %s2363 = scalar_lea.sflag [#allocation3], 1
    %2364 = vsyncpa %s2363, 1

</llo_original>
